<compile_context>
chip_gen: v5e
topology: v5e:2x2
jax: 0.10.0
libtpu: 0.0.40
codegen_flags: <defaults>
</compile_context>

<pallas_src>
import math

import jax
import jax.numpy as jnp
from jax.experimental import pallas as pl
from jax.experimental.pallas import tpu as pltpu

C = 64            # channel width of the residual trunk
K0 = 7            # initial conv kernel size
POOL0_STRIDE = 3  # MaxPool1d(kernel_size=1, stride=3)
POOL1_STRIDE = 7  # AvgPool1d(kernel_size=1, stride=7)


def _lengths(L):
    Lc = L - (K0 - 1)                       # Conv1d(1,64,7), no padding
    M = (Lc - 1) // POOL0_STRIDE + 1        # MaxPool1d(1, stride=3)
    K = (M - 1) // POOL1_STRIDE + 1         # AvgPool1d(1, stride=7)
    return Lc, M, K


# --------------------------------------------------------------------------- #
# Kernel                                                                      #
# --------------------------------------------------------------------------- #
def scan_conv_kernel(x7_ref, wcat_ref, p_ref, out_ref):
    """One laser scan per grid step.

    x7_ref  : (1, M, 7)  im2col of the input at the stride-3 sample points
    wcat_ref: (192, 64)  conv3 taps stacked [W(t-1); W(t); W(t+1)], each (Cin, Cout)
    p_ref   : (16, 64)   rows 0..6 = initial-conv taps, row 7 = its bias, row 8 = conv3 bias
    out_ref : (1, K, 64) stride-7 decimated final activation (channels-last)
    """
    n_out = out_ref.shape[1]

    x7 = x7_ref[0]                          # (M, 7)
    W = wcat_ref[...]                       # (192, 64)
    P = p_ref[...]                          # (16, 64)
    b0 = P[K0:K0 + 1, :]                    # (1, 64) initial-conv bias
    bc = P[K0 + 1:K0 + 2, :]                # (1, 64) shared conv3 bias

    # initialConv: Conv1d(1,64,7) fused with MaxPool1d(1,3) -> 7 VPU broadcast FMAs.
    h = x7[:, 0:1] * P[0:1, :] + b0
    for k in range(1, K0):
        h = h + x7[:, k:k + 1] * P[k:k + 1, :]          # (M, 64)

    Wm = W[0:C, :]            # tap applied to a[t-1]
    Wc = W[C:2 * C, :]        # tap applied to a[t]
    Wp = W[2 * C:3 * C, :]    # tap applied to a[t+1]
    zrow = jnp.zeros((1, C), jnp.float32)

    def conv3(a):
        # Conv1d(64,64,3,padding=1) in channels-last form: three shifted 2-D matmuls.
        am = jnp.concatenate([zrow, a[:-1, :]], axis=0)
        ap = jnp.concatenate([a[1:, :], zrow], axis=0)
        return (jnp.dot(am, Wm, preferred_element_type=jnp.float32)
                + jnp.dot(a, Wc, preferred_element_type=jnp.float32)
                + jnp.dot(ap, Wp, preferred_element_type=jnp.float32)
                + bc)

    last = h
    for _ in range(3):                       # additive residual blocks (shared conv weights)
        c = jnp.maximum(conv3(last), 0.0)
        c = conv3(c)
        c = c + last
        last = jnp.maximum(c, 0.0)

    c = jnp.maximum(conv3(last), 0.0)        # multiplicative block
    c = conv3(c)
    c = c * last                             # the trailing ReLU in the reference is unused

    # AvgPool1d(kernel=1, stride=7): take every 7th time step of the pre-ReLU product.
    pooled = jnp.concatenate(
        [c[POOL1_STRIDE * j:POOL1_STRIDE * j + 1, :] for j in range(n_out)], axis=0)
    out_ref[0] = pooled


# --------------------------------------------------------------------------- #
# Host-side packing / wrapper                                                 #
# --------------------------------------------------------------------------- #
def _pack_params(w0, b0, w, b):
    """Pack all parameters into two lane-friendly f32 arrays (fewer tiny DMAs)."""
    # conv3 weight (64, 64, 3) -> (192, 64); rows [64k:64k+64] = w[:, :, k].T (Cin, Cout)
    wcat = jnp.concatenate([w[:, :, k].T for k in range(3)], axis=0).astype(jnp.float32)
    small = jnp.zeros((16, C), jnp.float32)
    small = small.at[0:K0, :].set(w0[:, 0, :].T)   # (7, 64) initial-conv taps
    small = small.at[K0, :].set(b0)
    small = small.at[K0 + 1, :].set(b)
    return wcat, small


def _build_x7(x, M):
    """im2col of the (B,1,L) input at the stride-3 sampling points -> (B, M, 7)."""
    x1 = x[:, 0, :]
    idx = POOL0_STRIDE * jnp.arange(M)[:, None] + jnp.arange(K0)[None, :]
    return x1[:, idx]


def scan_single_conv_forward(x, params):
    """x: (B, 1, L) float32 (PyTorch NCW layout). Returns (B, 64*K), like conv.view(B, -1)."""
    w0, b0, w, b = params
    B, _, L = x.shape
    _, M, K = _lengths(L)

    x7 = _build_x7(x.astype(jnp.float32), M)
    wcat, small = _pack_params(w0, b0, w, b)

    flops = 2 * B * (M * K0 * C + 8 * 3 * M * C * C)
    bytes_accessed = 4 * (x7.size + wcat.size + small.size + B * K * C)

    out = pl.pallas_call(
        scan_conv_kernel,
        out_shape=jax.ShapeDtypeStruct((B, K, C), jnp.float32),
        grid=(B,),
        in_specs=[
            pl.BlockSpec((1, M, K0), lambda i: (i, 0, 0)),
            pl.BlockSpec((3 * C, C), lambda i: (0, 0)),
            pl.BlockSpec((16, C), lambda i: (0, 0)),
        ],
        out_specs=pl.BlockSpec((1, K, C), lambda i: (i, 0, 0)),
        compiler_params=pltpu.CompilerParams(
            dimension_semantics=("parallel",)),
        cost_estimate=pl.CostEstimate(
            flops=flops, transcendentals=0, bytes_accessed=bytes_accessed),
    )(x7, wcat, small)

    # PyTorch flattens (B, 64, K) channel-major: out[b, c*K + k].
    return jnp.transpose(out, (0, 2, 1)).reshape(B, C * K)


# --------------------------------------------------------------------------- #
# Synthetic parameters + pure-JAX reference                                   #
# --------------------------------------------------------------------------- #
def init_params(key):
    k = jax.random.split(key, 4)
    bnd0 = 1.0 / math.sqrt(1 * K0)
    w0 = jax.random.uniform(k[0], (C, 1, K0), jnp.float32, -bnd0, bnd0)  # Conv1d(1,64,7)
    b0 = jax.random.uniform(k[1], (C,), jnp.float32, -bnd0, bnd0)
    bnd = 1.0 / math.sqrt(C * 3)
    w = jax.random.uniform(k[2], (C, C, 3), jnp.float32, -bnd, bnd)      # Conv1d(64,64,3)
    b = jax.random.uniform(k[3], (C,), jnp.float32, -bnd, bnd)
    return w0, b0, w, b


def reference_forward(x, params):
    """Pure-JAX mirror of ScanSingleConvNet.forward (correctness check only)."""
    w0, b0, w, b = params
    B, _, L = x.shape
    Lc, _, _ = _lengths(L)
    x1 = x[:, 0, :]
    cols = jnp.stack([x1[:, k:k + Lc] for k in range(K0)], axis=-1)      # (B, Lc, 7)
    h = jnp.einsum("blk,kc->blc", cols, w0[:, 0, :].T) + b0              # (B, Lc, 64)
    h = h[:, ::POOL0_STRIDE, :]                                          # (B, M, 64)

    taps = [w[:, :, k].T for k in range(3)]

    def conv3(a):
        z = jnp.zeros_like(a[:, :1, :])
        am = jnp.concatenate([z, a[:, :-1, :]], axis=1)
        ap = jnp.concatenate([a[:, 1:, :], z], axis=1)
        return am @ taps[0] + a @ taps[1] + ap @ taps[2] + b

    last = h
    for _ in range(3):
        c = jax.nn.relu(conv3(last))
        c = conv3(c)
        c = c + last
        last = jax.nn.relu(c)
    c = jax.nn.relu(conv3(last))
    c = conv3(c)
    c = c * last
    pooled = c[:, ::POOL1_STRIDE, :]                                     # (B, K, 64)
    return jnp.transpose(pooled, (0, 2, 1)).reshape(B, -1)


if __name__ == "__main__":
    key = jax.random.PRNGKey(0)
    kx, kp = jax.random.split(key)

    B, L = 2, 64                      # small scan: input (B, 1, L) as the module expects
    x = jax.random.normal(kx, (B, 1, L), jnp.float32)
    params = init_params(kp)

    out = scan_single_conv_forward(x, params)
    jax.block_until_ready(out)

    _, M, K = _lengths(L)
    assert out.shape == (B, C * K), out.shape

    ref = reference_forward(x, params)
    err = float(jnp.max(jnp.abs(out - ref)))
    assert err < 1e-3, f"max abs error {err} vs pure-JAX reference"

    print("KERNEL_OK")
</pallas_src>

<mosaic_0001>
module attributes {stable_mosaic.version = 11 : i64} {
  func.func @scan_conv_kernel(%arg0: i32, %arg1: memref<1x20x7xf32, #tpu.memory_space<vmem>>, %arg2: memref<192x64xf32, #tpu.memory_space<vmem>>, %arg3: memref<16x64xf32, #tpu.memory_space<vmem>>, %arg4: memref<1x3x64xf32, #tpu.memory_space<vmem>>) attributes {dimension_semantics = [#tpu.dimension_semantics<parallel>], iteration_bounds = array<i64: 2>, scalar_prefetch = 0 : i64, scratch_operands = 0 : i64, tpu.core_type = #tpu.core_type<tc>, window_params = [{transform_indices = @transform_0, window_bounds = array<i64: 1, 20, 7>}, {pipeline_mode = #tpu.pipeline_mode<synchronous>, transform_indices = @transform_1, window_bounds = array<i64: 192, 64>}, {pipeline_mode = #tpu.pipeline_mode<synchronous>, transform_indices = @transform_2, window_bounds = array<i64: 16, 64>}, {transform_indices = @transform_3, window_bounds = array<i64: 1, 3, 64>}]} {
    %c0 = arith.constant 0 : index
    %c0_0 = arith.constant 0 : index
    %c0_1 = arith.constant 0 : index
    %0 = vector.load %arg1[%c0, %c0_0, %c0_1] : memref<1x20x7xf32, #tpu.memory_space<vmem>>, vector<1x20x7xf32>
    %1 = vector.shape_cast %0 : vector<1x20x7xf32> to vector<20x7xf32>
    %c0_2 = arith.constant 0 : index
    %c0_3 = arith.constant 0 : index
    %2 = vector.load %arg2[%c0_2, %c0_3] : memref<192x64xf32, #tpu.memory_space<vmem>>, vector<192x64xf32>
    %c0_4 = arith.constant 0 : index
    %c0_5 = arith.constant 0 : index
    %3 = vector.load %arg3[%c0_4, %c0_5] : memref<16x64xf32, #tpu.memory_space<vmem>>, vector<16x64xf32>
    %4 = vector.extract_strided_slice %3 {offsets = [7, 0], sizes = [1, 64], strides = [1, 1]} : vector<16x64xf32> to vector<1x64xf32>
    %5 = vector.extract_strided_slice %3 {offsets = [8, 0], sizes = [1, 64], strides = [1, 1]} : vector<16x64xf32> to vector<1x64xf32>
    %6 = vector.extract_strided_slice %1 {offsets = [0, 0], sizes = [20, 1], strides = [1, 1]} : vector<20x7xf32> to vector<20x1xf32>
    %7 = vector.extract_strided_slice %3 {offsets = [0, 0], sizes = [1, 64], strides = [1, 1]} : vector<16x64xf32> to vector<1x64xf32>
    %8 = vector.broadcast %6 : vector<20x1xf32> to vector<20x64xf32>
    %9 = vector.broadcast %7 : vector<1x64xf32> to vector<20x64xf32>
    %10 = arith.mulf %8, %9 : vector<20x64xf32>
    %11 = vector.broadcast %4 : vector<1x64xf32> to vector<20x64xf32>
    %12 = arith.addf %10, %11 : vector<20x64xf32>
    %13 = vector.extract_strided_slice %1 {offsets = [0, 1], sizes = [20, 1], strides = [1, 1]} : vector<20x7xf32> to vector<20x1xf32>
    %14 = vector.extract_strided_slice %3 {offsets = [1, 0], sizes = [1, 64], strides = [1, 1]} : vector<16x64xf32> to vector<1x64xf32>
    %15 = vector.broadcast %13 : vector<20x1xf32> to vector<20x64xf32>
    %16 = vector.broadcast %14 : vector<1x64xf32> to vector<20x64xf32>
    %17 = arith.mulf %15, %16 : vector<20x64xf32>
    %18 = arith.addf %12, %17 : vector<20x64xf32>
    %19 = vector.extract_strided_slice %1 {offsets = [0, 2], sizes = [20, 1], strides = [1, 1]} : vector<20x7xf32> to vector<20x1xf32>
    %20 = vector.extract_strided_slice %3 {offsets = [2, 0], sizes = [1, 64], strides = [1, 1]} : vector<16x64xf32> to vector<1x64xf32>
    %21 = vector.broadcast %19 : vector<20x1xf32> to vector<20x64xf32>
    %22 = vector.broadcast %20 : vector<1x64xf32> to vector<20x64xf32>
    %23 = arith.mulf %21, %22 : vector<20x64xf32>
    %24 = arith.addf %18, %23 : vector<20x64xf32>
    %25 = vector.extract_strided_slice %1 {offsets = [0, 3], sizes = [20, 1], strides = [1, 1]} : vector<20x7xf32> to vector<20x1xf32>
    %26 = vector.extract_strided_slice %3 {offsets = [3, 0], sizes = [1, 64], strides = [1, 1]} : vector<16x64xf32> to vector<1x64xf32>
    %27 = vector.broadcast %25 : vector<20x1xf32> to vector<20x64xf32>
    %28 = vector.broadcast %26 : vector<1x64xf32> to vector<20x64xf32>
    %29 = arith.mulf %27, %28 : vector<20x64xf32>
    %30 = arith.addf %24, %29 : vector<20x64xf32>
    %31 = vector.extract_strided_slice %1 {offsets = [0, 4], sizes = [20, 1], strides = [1, 1]} : vector<20x7xf32> to vector<20x1xf32>
    %32 = vector.extract_strided_slice %3 {offsets = [4, 0], sizes = [1, 64], strides = [1, 1]} : vector<16x64xf32> to vector<1x64xf32>
    %33 = vector.broadcast %31 : vector<20x1xf32> to vector<20x64xf32>
    %34 = vector.broadcast %32 : vector<1x64xf32> to vector<20x64xf32>
    %35 = arith.mulf %33, %34 : vector<20x64xf32>
    %36 = arith.addf %30, %35 : vector<20x64xf32>
    %37 = vector.extract_strided_slice %1 {offsets = [0, 5], sizes = [20, 1], strides = [1, 1]} : vector<20x7xf32> to vector<20x1xf32>
    %38 = vector.extract_strided_slice %3 {offsets = [5, 0], sizes = [1, 64], strides = [1, 1]} : vector<16x64xf32> to vector<1x64xf32>
    %39 = vector.broadcast %37 : vector<20x1xf32> to vector<20x64xf32>
    %40 = vector.broadcast %38 : vector<1x64xf32> to vector<20x64xf32>
    %41 = arith.mulf %39, %40 : vector<20x64xf32>
    %42 = arith.addf %36, %41 : vector<20x64xf32>
    %43 = vector.extract_strided_slice %1 {offsets = [0, 6], sizes = [20, 1], strides = [1, 1]} : vector<20x7xf32> to vector<20x1xf32>
    %44 = vector.extract_strided_slice %3 {offsets = [6, 0], sizes = [1, 64], strides = [1, 1]} : vector<16x64xf32> to vector<1x64xf32>
    %45 = vector.broadcast %43 : vector<20x1xf32> to vector<20x64xf32>
    %46 = vector.broadcast %44 : vector<1x64xf32> to vector<20x64xf32>
    %47 = arith.mulf %45, %46 : vector<20x64xf32>
    %48 = arith.addf %42, %47 : vector<20x64xf32>
    %49 = vector.extract_strided_slice %2 {offsets = [0, 0], sizes = [64, 64], strides = [1, 1]} : vector<192x64xf32> to vector<64x64xf32>
    %50 = vector.extract_strided_slice %2 {offsets = [64, 0], sizes = [64, 64], strides = [1, 1]} : vector<192x64xf32> to vector<64x64xf32>
    %51 = vector.extract_strided_slice %2 {offsets = [128, 0], sizes = [64, 64], strides = [1, 1]} : vector<192x64xf32> to vector<64x64xf32>
    %cst = arith.constant 0.000000e+00 : f32
    %52 = vector.broadcast %cst : f32 to vector<1x64xf32>
    %53 = vector.extract_strided_slice %48 {offsets = [0, 0], sizes = [19, 64], strides = [1, 1]} : vector<20x64xf32> to vector<19x64xf32>
    %54 = tpu.concatenate %52, %53 in 0 : vector<1x64xf32>, vector<19x64xf32> -> vector<20x64xf32>
    %55 = vector.extract_strided_slice %48 {offsets = [1, 0], sizes = [19, 64], strides = [1, 1]} : vector<20x64xf32> to vector<19x64xf32>
    %56 = tpu.concatenate %55, %52 in 0 : vector<19x64xf32>, vector<1x64xf32> -> vector<20x64xf32>
    %cst_6 = arith.constant dense<0.000000e+00> : vector<20x64xf32>
    %57 = tpu.matmul %54, %49, %cst_6 {dimension_numbers = #tpu.dot_dimension_numbers<[1], [0], [0], [1], [0, 0, 1, 1], [], []>} : vector<20x64xf32>, vector<64x64xf32>, vector<20x64xf32> -> vector<20x64xf32>
    %cst_7 = arith.constant dense<0.000000e+00> : vector<20x64xf32>
    %58 = tpu.matmul %48, %50, %cst_7 {dimension_numbers = #tpu.dot_dimension_numbers<[1], [0], [0], [1], [0, 0, 1, 1], [], []>} : vector<20x64xf32>, vector<64x64xf32>, vector<20x64xf32> -> vector<20x64xf32>
    %59 = arith.addf %57, %58 : vector<20x64xf32>
    %cst_8 = arith.constant dense<0.000000e+00> : vector<20x64xf32>
    %60 = tpu.matmul %56, %51, %cst_8 {dimension_numbers = #tpu.dot_dimension_numbers<[1], [0], [0], [1], [0, 0, 1, 1], [], []>} : vector<20x64xf32>, vector<64x64xf32>, vector<20x64xf32> -> vector<20x64xf32>
    %61 = arith.addf %59, %60 : vector<20x64xf32>
    %62 = vector.broadcast %5 : vector<1x64xf32> to vector<20x64xf32>
    %63 = arith.addf %61, %62 : vector<20x64xf32>
    %cst_9 = arith.constant 0.000000e+00 : f32
    %64 = vector.broadcast %cst_9 : f32 to vector<20x64xf32>
    %65 = arith.maximumf %63, %64 : vector<20x64xf32>
    %66 = vector.extract_strided_slice %65 {offsets = [0, 0], sizes = [19, 64], strides = [1, 1]} : vector<20x64xf32> to vector<19x64xf32>
    %67 = tpu.concatenate %52, %66 in 0 : vector<1x64xf32>, vector<19x64xf32> -> vector<20x64xf32>
    %68 = vector.extract_strided_slice %65 {offsets = [1, 0], sizes = [19, 64], strides = [1, 1]} : vector<20x64xf32> to vector<19x64xf32>
    %69 = tpu.concatenate %68, %52 in 0 : vector<19x64xf32>, vector<1x64xf32> -> vector<20x64xf32>
    %cst_10 = arith.constant dense<0.000000e+00> : vector<20x64xf32>
    %70 = tpu.matmul %67, %49, %cst_10 {dimension_numbers = #tpu.dot_dimension_numbers<[1], [0], [0], [1], [0, 0, 1, 1], [], []>} : vector<20x64xf32>, vector<64x64xf32>, vector<20x64xf32> -> vector<20x64xf32>
    %cst_11 = arith.constant dense<0.000000e+00> : vector<20x64xf32>
    %71 = tpu.matmul %65, %50, %cst_11 {dimension_numbers = #tpu.dot_dimension_numbers<[1], [0], [0], [1], [0, 0, 1, 1], [], []>} : vector<20x64xf32>, vector<64x64xf32>, vector<20x64xf32> -> vector<20x64xf32>
    %72 = arith.addf %70, %71 : vector<20x64xf32>
    %cst_12 = arith.constant dense<0.000000e+00> : vector<20x64xf32>
    %73 = tpu.matmul %69, %51, %cst_12 {dimension_numbers = #tpu.dot_dimension_numbers<[1], [0], [0], [1], [0, 0, 1, 1], [], []>} : vector<20x64xf32>, vector<64x64xf32>, vector<20x64xf32> -> vector<20x64xf32>
    %74 = arith.addf %72, %73 : vector<20x64xf32>
    %75 = vector.broadcast %5 : vector<1x64xf32> to vector<20x64xf32>
    %76 = arith.addf %74, %75 : vector<20x64xf32>
    %77 = arith.addf %76, %48 : vector<20x64xf32>
    %cst_13 = arith.constant 0.000000e+00 : f32
    %78 = vector.broadcast %cst_13 : f32 to vector<20x64xf32>
    %79 = arith.maximumf %77, %78 : vector<20x64xf32>
    %80 = vector.extract_strided_slice %79 {offsets = [0, 0], sizes = [19, 64], strides = [1, 1]} : vector<20x64xf32> to vector<19x64xf32>
    %81 = tpu.concatenate %52, %80 in 0 : vector<1x64xf32>, vector<19x64xf32> -> vector<20x64xf32>
    %82 = vector.extract_strided_slice %79 {offsets = [1, 0], sizes = [19, 64], strides = [1, 1]} : vector<20x64xf32> to vector<19x64xf32>
    %83 = tpu.concatenate %82, %52 in 0 : vector<19x64xf32>, vector<1x64xf32> -> vector<20x64xf32>
    %cst_14 = arith.constant dense<0.000000e+00> : vector<20x64xf32>
    %84 = tpu.matmul %81, %49, %cst_14 {dimension_numbers = #tpu.dot_dimension_numbers<[1], [0], [0], [1], [0, 0, 1, 1], [], []>} : vector<20x64xf32>, vector<64x64xf32>, vector<20x64xf32> -> vector<20x64xf32>
    %cst_15 = arith.constant dense<0.000000e+00> : vector<20x64xf32>
    %85 = tpu.matmul %79, %50, %cst_15 {dimension_numbers = #tpu.dot_dimension_numbers<[1], [0], [0], [1], [0, 0, 1, 1], [], []>} : vector<20x64xf32>, vector<64x64xf32>, vector<20x64xf32> -> vector<20x64xf32>
    %86 = arith.addf %84, %85 : vector<20x64xf32>
    %cst_16 = arith.constant dense<0.000000e+00> : vector<20x64xf32>
    %87 = tpu.matmul %83, %51, %cst_16 {dimension_numbers = #tpu.dot_dimension_numbers<[1], [0], [0], [1], [0, 0, 1, 1], [], []>} : vector<20x64xf32>, vector<64x64xf32>, vector<20x64xf32> -> vector<20x64xf32>
    %88 = arith.addf %86, %87 : vector<20x64xf32>
    %89 = vector.broadcast %5 : vector<1x64xf32> to vector<20x64xf32>
    %90 = arith.addf %88, %89 : vector<20x64xf32>
    %cst_17 = arith.constant 0.000000e+00 : f32
    %91 = vector.broadcast %cst_17 : f32 to vector<20x64xf32>
    %92 = arith.maximumf %90, %91 : vector<20x64xf32>
    %93 = vector.extract_strided_slice %92 {offsets = [0, 0], sizes = [19, 64], strides = [1, 1]} : vector<20x64xf32> to vector<19x64xf32>
    %94 = tpu.concatenate %52, %93 in 0 : vector<1x64xf32>, vector<19x64xf32> -> vector<20x64xf32>
    %95 = vector.extract_strided_slice %92 {offsets = [1, 0], sizes = [19, 64], strides = [1, 1]} : vector<20x64xf32> to vector<19x64xf32>
    %96 = tpu.concatenate %95, %52 in 0 : vector<19x64xf32>, vector<1x64xf32> -> vector<20x64xf32>
    %cst_18 = arith.constant dense<0.000000e+00> : vector<20x64xf32>
    %97 = tpu.matmul %94, %49, %cst_18 {dimension_numbers = #tpu.dot_dimension_numbers<[1], [0], [0], [1], [0, 0, 1, 1], [], []>} : vector<20x64xf32>, vector<64x64xf32>, vector<20x64xf32> -> vector<20x64xf32>
    %cst_19 = arith.constant dense<0.000000e+00> : vector<20x64xf32>
    %98 = tpu.matmul %92, %50, %cst_19 {dimension_numbers = #tpu.dot_dimension_numbers<[1], [0], [0], [1], [0, 0, 1, 1], [], []>} : vector<20x64xf32>, vector<64x64xf32>, vector<20x64xf32> -> vector<20x64xf32>
    %99 = arith.addf %97, %98 : vector<20x64xf32>
    %cst_20 = arith.constant dense<0.000000e+00> : vector<20x64xf32>
    %100 = tpu.matmul %96, %51, %cst_20 {dimension_numbers = #tpu.dot_dimension_numbers<[1], [0], [0], [1], [0, 0, 1, 1], [], []>} : vector<20x64xf32>, vector<64x64xf32>, vector<20x64xf32> -> vector<20x64xf32>
    %101 = arith.addf %99, %100 : vector<20x64xf32>
    %102 = vector.broadcast %5 : vector<1x64xf32> to vector<20x64xf32>
    %103 = arith.addf %101, %102 : vector<20x64xf32>
    %104 = arith.addf %103, %79 : vector<20x64xf32>
    %cst_21 = arith.constant 0.000000e+00 : f32
    %105 = vector.broadcast %cst_21 : f32 to vector<20x64xf32>
    %106 = arith.maximumf %104, %105 : vector<20x64xf32>
    %107 = vector.extract_strided_slice %106 {offsets = [0, 0], sizes = [19, 64], strides = [1, 1]} : vector<20x64xf32> to vector<19x64xf32>
    %108 = tpu.concatenate %52, %107 in 0 : vector<1x64xf32>, vector<19x64xf32> -> vector<20x64xf32>
    %109 = vector.extract_strided_slice %106 {offsets = [1, 0], sizes = [19, 64], strides = [1, 1]} : vector<20x64xf32> to vector<19x64xf32>
    %110 = tpu.concatenate %109, %52 in 0 : vector<19x64xf32>, vector<1x64xf32> -> vector<20x64xf32>
    %cst_22 = arith.constant dense<0.000000e+00> : vector<20x64xf32>
    %111 = tpu.matmul %108, %49, %cst_22 {dimension_numbers = #tpu.dot_dimension_numbers<[1], [0], [0], [1], [0, 0, 1, 1], [], []>} : vector<20x64xf32>, vector<64x64xf32>, vector<20x64xf32> -> vector<20x64xf32>
    %cst_23 = arith.constant dense<0.000000e+00> : vector<20x64xf32>
    %112 = tpu.matmul %106, %50, %cst_23 {dimension_numbers = #tpu.dot_dimension_numbers<[1], [0], [0], [1], [0, 0, 1, 1], [], []>} : vector<20x64xf32>, vector<64x64xf32>, vector<20x64xf32> -> vector<20x64xf32>
    %113 = arith.addf %111, %112 : vector<20x64xf32>
    %cst_24 = arith.constant dense<0.000000e+00> : vector<20x64xf32>
    %114 = tpu.matmul %110, %51, %cst_24 {dimension_numbers = #tpu.dot_dimension_numbers<[1], [0], [0], [1], [0, 0, 1, 1], [], []>} : vector<20x64xf32>, vector<64x64xf32>, vector<20x64xf32> -> vector<20x64xf32>
    %115 = arith.addf %113, %114 : vector<20x64xf32>
    %116 = vector.broadcast %5 : vector<1x64xf32> to vector<20x64xf32>
    %117 = arith.addf %115, %116 : vector<20x64xf32>
    %cst_25 = arith.constant 0.000000e+00 : f32
    %118 = vector.broadcast %cst_25 : f32 to vector<20x64xf32>
    %119 = arith.maximumf %117, %118 : vector<20x64xf32>
    %120 = vector.extract_strided_slice %119 {offsets = [0, 0], sizes = [19, 64], strides = [1, 1]} : vector<20x64xf32> to vector<19x64xf32>
    %121 = tpu.concatenate %52, %120 in 0 : vector<1x64xf32>, vector<19x64xf32> -> vector<20x64xf32>
    %122 = vector.extract_strided_slice %119 {offsets = [1, 0], sizes = [19, 64], strides = [1, 1]} : vector<20x64xf32> to vector<19x64xf32>
    %123 = tpu.concatenate %122, %52 in 0 : vector<19x64xf32>, vector<1x64xf32> -> vector<20x64xf32>
    %cst_26 = arith.constant dense<0.000000e+00> : vector<20x64xf32>
    %124 = tpu.matmul %121, %49, %cst_26 {dimension_numbers = #tpu.dot_dimension_numbers<[1], [0], [0], [1], [0, 0, 1, 1], [], []>} : vector<20x64xf32>, vector<64x64xf32>, vector<20x64xf32> -> vector<20x64xf32>
    %cst_27 = arith.constant dense<0.000000e+00> : vector<20x64xf32>
    %125 = tpu.matmul %119, %50, %cst_27 {dimension_numbers = #tpu.dot_dimension_numbers<[1], [0], [0], [1], [0, 0, 1, 1], [], []>} : vector<20x64xf32>, vector<64x64xf32>, vector<20x64xf32> -> vector<20x64xf32>
    %126 = arith.addf %124, %125 : vector<20x64xf32>
    %cst_28 = arith.constant dense<0.000000e+00> : vector<20x64xf32>
    %127 = tpu.matmul %123, %51, %cst_28 {dimension_numbers = #tpu.dot_dimension_numbers<[1], [0], [0], [1], [0, 0, 1, 1], [], []>} : vector<20x64xf32>, vector<64x64xf32>, vector<20x64xf32> -> vector<20x64xf32>
    %128 = arith.addf %126, %127 : vector<20x64xf32>
    %129 = vector.broadcast %5 : vector<1x64xf32> to vector<20x64xf32>
    %130 = arith.addf %128, %129 : vector<20x64xf32>
    %131 = arith.addf %130, %106 : vector<20x64xf32>
    %cst_29 = arith.constant 0.000000e+00 : f32
    %132 = vector.broadcast %cst_29 : f32 to vector<20x64xf32>
    %133 = arith.maximumf %131, %132 : vector<20x64xf32>
    %134 = vector.extract_strided_slice %133 {offsets = [0, 0], sizes = [19, 64], strides = [1, 1]} : vector<20x64xf32> to vector<19x64xf32>
    %135 = tpu.concatenate %52, %134 in 0 : vector<1x64xf32>, vector<19x64xf32> -> vector<20x64xf32>
    %136 = vector.extract_strided_slice %133 {offsets = [1, 0], sizes = [19, 64], strides = [1, 1]} : vector<20x64xf32> to vector<19x64xf32>
    %137 = tpu.concatenate %136, %52 in 0 : vector<19x64xf32>, vector<1x64xf32> -> vector<20x64xf32>
    %cst_30 = arith.constant dense<0.000000e+00> : vector<20x64xf32>
    %138 = tpu.matmul %135, %49, %cst_30 {dimension_numbers = #tpu.dot_dimension_numbers<[1], [0], [0], [1], [0, 0, 1, 1], [], []>} : vector<20x64xf32>, vector<64x64xf32>, vector<20x64xf32> -> vector<20x64xf32>
    %cst_31 = arith.constant dense<0.000000e+00> : vector<20x64xf32>
    %139 = tpu.matmul %133, %50, %cst_31 {dimension_numbers = #tpu.dot_dimension_numbers<[1], [0], [0], [1], [0, 0, 1, 1], [], []>} : vector<20x64xf32>, vector<64x64xf32>, vector<20x64xf32> -> vector<20x64xf32>
    %140 = arith.addf %138, %139 : vector<20x64xf32>
    %cst_32 = arith.constant dense<0.000000e+00> : vector<20x64xf32>
    %141 = tpu.matmul %137, %51, %cst_32 {dimension_numbers = #tpu.dot_dimension_numbers<[1], [0], [0], [1], [0, 0, 1, 1], [], []>} : vector<20x64xf32>, vector<64x64xf32>, vector<20x64xf32> -> vector<20x64xf32>
    %142 = arith.addf %140, %141 : vector<20x64xf32>
    %143 = vector.broadcast %5 : vector<1x64xf32> to vector<20x64xf32>
    %144 = arith.addf %142, %143 : vector<20x64xf32>
    %cst_33 = arith.constant 0.000000e+00 : f32
    %145 = vector.broadcast %cst_33 : f32 to vector<20x64xf32>
    %146 = arith.maximumf %144, %145 : vector<20x64xf32>
    %147 = vector.extract_strided_slice %146 {offsets = [0, 0], sizes = [19, 64], strides = [1, 1]} : vector<20x64xf32> to vector<19x64xf32>
    %148 = tpu.concatenate %52, %147 in 0 : vector<1x64xf32>, vector<19x64xf32> -> vector<20x64xf32>
    %149 = vector.extract_strided_slice %146 {offsets = [1, 0], sizes = [19, 64], strides = [1, 1]} : vector<20x64xf32> to vector<19x64xf32>
    %150 = tpu.concatenate %149, %52 in 0 : vector<19x64xf32>, vector<1x64xf32> -> vector<20x64xf32>
    %cst_34 = arith.constant dense<0.000000e+00> : vector<20x64xf32>
    %151 = tpu.matmul %148, %49, %cst_34 {dimension_numbers = #tpu.dot_dimension_numbers<[1], [0], [0], [1], [0, 0, 1, 1], [], []>} : vector<20x64xf32>, vector<64x64xf32>, vector<20x64xf32> -> vector<20x64xf32>
    %cst_35 = arith.constant dense<0.000000e+00> : vector<20x64xf32>
    %152 = tpu.matmul %146, %50, %cst_35 {dimension_numbers = #tpu.dot_dimension_numbers<[1], [0], [0], [1], [0, 0, 1, 1], [], []>} : vector<20x64xf32>, vector<64x64xf32>, vector<20x64xf32> -> vector<20x64xf32>
    %153 = arith.addf %151, %152 : vector<20x64xf32>
    %cst_36 = arith.constant dense<0.000000e+00> : vector<20x64xf32>
    %154 = tpu.matmul %150, %51, %cst_36 {dimension_numbers = #tpu.dot_dimension_numbers<[1], [0], [0], [1], [0, 0, 1, 1], [], []>} : vector<20x64xf32>, vector<64x64xf32>, vector<20x64xf32> -> vector<20x64xf32>
    %155 = arith.addf %153, %154 : vector<20x64xf32>
    %156 = vector.broadcast %5 : vector<1x64xf32> to vector<20x64xf32>
    %157 = arith.addf %155, %156 : vector<20x64xf32>
    %158 = arith.mulf %157, %133 : vector<20x64xf32>
    %159 = vector.extract_strided_slice %158 {offsets = [0, 0], sizes = [1, 64], strides = [1, 1]} : vector<20x64xf32> to vector<1x64xf32>
    %160 = vector.extract_strided_slice %158 {offsets = [7, 0], sizes = [1, 64], strides = [1, 1]} : vector<20x64xf32> to vector<1x64xf32>
    %161 = vector.extract_strided_slice %158 {offsets = [14, 0], sizes = [1, 64], strides = [1, 1]} : vector<20x64xf32> to vector<1x64xf32>
    %162 = tpu.concatenate %159, %160, %161 in 0 : vector<1x64xf32>, vector<1x64xf32>, vector<1x64xf32> -> vector<3x64xf32>
    %c0_37 = arith.constant 0 : index
    %c0_38 = arith.constant 0 : index
    %c0_39 = arith.constant 0 : index
    %163 = vector.load %arg4[%c0_37, %c0_38, %c0_39] : memref<1x3x64xf32, #tpu.memory_space<vmem>>, vector<1x3x64xf32>
    %164 = vector.shape_cast %163 : vector<1x3x64xf32> to vector<3x64xf32>
    %165 = vector.shape_cast %162 : vector<3x64xf32> to vector<1x3x64xf32>
    tpu.vector_store %arg4[%c0_37, %c0_38, %c0_39], %165 {strides = array<i32>} : memref<1x3x64xf32, #tpu.memory_space<vmem>>, vector<1x3x64xf32>,
    return
  }
  func.func @transform_0(%arg0: i32) -> (i32, i32, i32) {
    %c0_i32 = arith.constant 0 : i32
    %c0_i32_0 = arith.constant 0 : i32
    %c0_i32_1 = arith.constant 0 : i32
    return %arg0, %c0_i32, %c0_i32_0 : i32, i32, i32
  }
  func.func @transform_1(%arg0: i32) -> (i32, i32) {
    %c0_i32 = arith.constant 0 : i32
    %c0_i32_0 = arith.constant 0 : i32
    %c0_i32_1 = arith.constant 0 : i32
    return %c0_i32, %c0_i32_0 : i32, i32
  }
  func.func @transform_2(%arg0: i32) -> (i32, i32) {
    %c0_i32 = arith.constant 0 : i32
    %c0_i32_0 = arith.constant 0 : i32
    %c0_i32_1 = arith.constant 0 : i32
    return %c0_i32, %c0_i32_0 : i32, i32
  }
  func.func @transform_3(%arg0: i32) -> (i32, i32, i32) {
    %c0_i32 = arith.constant 0 : i32
    %c0_i32_0 = arith.constant 0 : i32
    %c0_i32_1 = arith.constant 0 : i32
    return %arg0, %c0_i32, %c0_i32_0 : i32, i32, i32
  }
}

</mosaic_0001>

<llo_original>
// kernel: tpu_custom_call.1
$region0: #{tpu_custom_call.1}
  #allocation0 [shape = 'u32[]', space=smem, size = 0x4, offset = 0x4, fixed_abs, tag = 'smem constant byte address 0x4 - core index']
  #allocation1 [shape = 'u32[72,128]{1,0:T(1,128)}', space=vmem, size = 0x9000, scoped, tag = 'internal scratch']
  %s0 = inlined_call_operand.vmem [shape: f32[2,20,7], index: 0, kind: input, shape index: {}]
  %s1 = inlined_call_operand.vmem [shape: f32[192,64], index: 1, kind: input, shape index: {}]
  %s2 = inlined_call_operand.vmem [shape: f32[16,64], index: 2, kind: input, shape index: {}]
  %s3 = inlined_call_operand.vmem [shape: f32[2,3,64], index: 3, kind: output, shape index: {}]
  %s4 = sld [smem:[#allocation0]]
  $region45: #{tpu_custom_call.1} parent=0
    _
  %s6 = ssub.s32 1, %s4
  %s7 = scalar_select 0, %s6, %s4
  loop: start=0, step=1, limit=4
  $region2: #{tpu_custom_call.1} parent=0 // loop_pre_header
    _
  $region3: #{tpu_custom_call.1} parent=0 // loop_header
    %s9 = sphi 0, %s13
    %p10 = scmp.ge.s32.totalorder %s9, 4
    %s19 = sphi 0, %s21
    %s22 = sphi 0, %s19
    %s23 = sphi 0, %s22
    %s39 = sphi 0, %s23
    %s43 = sphi 0, %s43
    %s45 = sphi 0, %s43
    %s46 = sphi 0, %s45
    %s60 = sphi 0, %s46
    %s64 = sphi 0, %s64
    %s66 = sphi 0, %s64
    %s67 = sphi 0, %s66
    %s81 = sphi 0, %s67
    %s87 = sphi 0, %s89
    %s90 = sphi 0, %s87
    %s91 = sphi 0, %s90
    %s107 = sphi 0, %s91
  $region4: #{tpu_custom_call.1} parent=0 // loop_header_branch
    %12 = sbr.rel (%p10) target = $region8
  $region5: #{tpu_custom_call.1} parent=0 // loop_body
    %s14 = ssub.s32 %s9, 1
    %s15 = ssub.s32 %s9, 2
    %s16 = sadd.s32 %s9, 1
    %s17 = ssub.s32 %s9, %s16
    %p18 = scmp.eq.s32.totalorder %s17, 0
    %s20 = sadd.s32 %s19, 1
    %s21 = scalar_select %p18, %s19, %s20
    %p24 = pneg %p18
    %p25 = scmp.eq.s32.totalorder %s9, 1
    %p26 = por %p24, %p25
    %p27 = scmp.ne.s32.totalorder %s19, %s22
    %p28 = scmp.eq.s32.totalorder %s9, 0
    %p29 = por %p27, %p28
    %p30 = scmp.ne.s32.totalorder %s19, %s22
    %p31 = scmp.eq.s32.totalorder %s14, 1
    %p32 = por %p30, %p31
    %p33 = scmp.ne.s32.totalorder %s22, %s23
    %p34 = scmp.eq.s32.totalorder %s14, 0
    %p35 = por %p33, %p34
    %p36 = scmp.ne.s32.totalorder %s22, %s23
    %p37 = scmp.eq.s32.totalorder %s15, 1
    %p38 = por %p36, %p37
    %p40 = scmp.ne.s32.totalorder %s23, %s39
    %p41 = scmp.eq.s32.totalorder %s15, 0
    %p42 = por %p40, %p41
    %s44 = sadd.s32 %s43, 1
    %p47 = scmp.eq.s32.totalorder %s9, 1
    %p48 = scmp.ne.s32.totalorder %s43, %s45
    %p49 = scmp.eq.s32.totalorder %s9, 0
    %p50 = por %p48, %p49
    %p51 = scmp.ne.s32.totalorder %s43, %s45
    %p52 = scmp.eq.s32.totalorder %s14, 1
    %p53 = por %p51, %p52
    %p54 = scmp.ne.s32.totalorder %s45, %s46
    %p55 = scmp.eq.s32.totalorder %s14, 0
    %p56 = por %p54, %p55
    %p57 = scmp.ne.s32.totalorder %s45, %s46
    %p58 = scmp.eq.s32.totalorder %s15, 1
    %p59 = por %p57, %p58
    %p61 = scmp.ne.s32.totalorder %s46, %s60
    %p62 = scmp.eq.s32.totalorder %s15, 0
    %p63 = por %p61, %p62
    %s65 = sadd.s32 %s64, 1
    %p68 = scmp.eq.s32.totalorder %s9, 1
    %p69 = scmp.ne.s32.totalorder %s64, %s66
    %p70 = scmp.eq.s32.totalorder %s9, 0
    %p71 = por %p69, %p70
    %p72 = scmp.ne.s32.totalorder %s64, %s66
    %p73 = scmp.eq.s32.totalorder %s14, 1
    %p74 = por %p72, %p73
    %p75 = scmp.ne.s32.totalorder %s66, %s67
    %p76 = scmp.eq.s32.totalorder %s14, 0
    %p77 = por %p75, %p76
    %p78 = scmp.ne.s32.totalorder %s66, %s67
    %p79 = scmp.eq.s32.totalorder %s15, 1
    %p80 = por %p78, %p79
    %p82 = scmp.ne.s32.totalorder %s67, %s81
    %p83 = scmp.eq.s32.totalorder %s15, 0
    %p84 = por %p82, %p83
    %s85 = ssub.s32 %s9, %s16
    %p86 = scmp.eq.s32.totalorder %s85, 0
    %s88 = sadd.s32 %s87, 1
    %s89 = scalar_select %p86, %s87, %s88
    %p92 = pneg %p86
    %p93 = scmp.eq.s32.totalorder %s9, 1
    %p94 = por %p92, %p93
    %p95 = scmp.ne.s32.totalorder %s87, %s90
    %p96 = scmp.eq.s32.totalorder %s9, 0
    %p97 = por %p95, %p96
    %p98 = scmp.ne.s32.totalorder %s87, %s90
    %p99 = scmp.eq.s32.totalorder %s14, 1
    %p100 = por %p98, %p99
    %p101 = scmp.ne.s32.totalorder %s90, %s91
    %p102 = scmp.eq.s32.totalorder %s14, 0
    %p103 = por %p101, %p102
    %p104 = scmp.ne.s32.totalorder %s90, %s91
    %p105 = scmp.eq.s32.totalorder %s15, 1
    %p106 = por %p104, %p105
    %p108 = scmp.ne.s32.totalorder %s91, %s107
    %p109 = scmp.eq.s32.totalorder %s15, 0
    %p110 = por %p108, %p109
    %p111 = scmp.le.s32.totalorder 1, %s9
    %p112 = scmp.lt.s32.totalorder %s9, 3
    %p113 = pnand %p111, %p112
    %p114 = pneg %p113
    // Predicated region
    $region9: #{tpu_custom_call.1} parent=5 // pred_check
      _
    $region10: #{tpu_custom_call.1} parent=5 // pred_check_branch
      %116 = sbr.rel (%p113) target = $region12
    $region11: #{tpu_custom_call.1} parent=5 // pred_region
      %s117 = ssub.s32 %s9, 1
      // Predicated region
      $region13: #{tpu_custom_call.1} parent=11 // pred_check
        %p118 = pneg %p56
      $region14: #{tpu_custom_call.1} parent=11 // pred_check_branch
        %120 = sbr.rel (%p118) target = $region16
      $region15: #{tpu_custom_call.1} parent=11 // pred_region
        _
      $region16: #{tpu_custom_call.1} parent=11 // pred_fallthru
        _
      // Predicated region
      $region17: #{tpu_custom_call.1} parent=11 // pred_check
        %p121 = pneg %p77
      $region18: #{tpu_custom_call.1} parent=11 // pred_check_branch
        %123 = sbr.rel (%p121) target = $region20
      $region19: #{tpu_custom_call.1} parent=11 // pred_region
        _
      $region20: #{tpu_custom_call.1} parent=11 // pred_fallthru
        _
    $region12: #{tpu_custom_call.1} parent=5 // pred_fallthru
      _
    %p124 = scmp.lt.s32.totalorder %s9, 2
    // Predicated region
    $region21: #{tpu_custom_call.1} parent=5 // pred_check
      %p125 = pneg %p124
    $region22: #{tpu_custom_call.1} parent=5 // pred_check_branch
      %127 = sbr.rel (%p125) target = $region24
    $region23: #{tpu_custom_call.1} parent=5 // pred_region
      // Predicated region
      $region25: #{tpu_custom_call.1} parent=23 // pred_check
        %p128 = pneg %p29
      $region26: #{tpu_custom_call.1} parent=23 // pred_check_branch
        %130 = sbr.rel (%p128) target = $region28
      $region27: #{tpu_custom_call.1} parent=23 // pred_region
        %p131 = scmp.lt.s32.totalorder %s9, 1
        %s132 = scalar_select %p131, %s9, 1
        %s133 = smul.addr %s132, 3
        %s134 = smul.addr %s133, 8
        %s135 = scalar_lea.vmem %s0, %s134
      $region28: #{tpu_custom_call.1} parent=23 // pred_fallthru
        _
    $region24: #{tpu_custom_call.1} parent=5 // pred_fallthru
      _
    %p136 = scmp.le.s32.totalorder 1, %s9
    %p137 = scmp.lt.s32.totalorder %s9, 3
    %p138 = pnand %p136, %p137
    %p139 = pneg %p138
    // Predicated region
    $region29: #{tpu_custom_call.1} parent=5 // pred_check
      _
    $region30: #{tpu_custom_call.1} parent=5 // pred_check_branch
      %141 = sbr.rel (%p138) target = $region32
    $region31: #{tpu_custom_call.1} parent=5 // pred_region
      %s142 = ssub.s32 %s9, 1
      %p143 = scmp.lt.s32.totalorder %s14, 1
      %s144 = scalar_select %p143, %s14, 1
      %s145 = smul.addr %s144, 3
      %s146 = smul.addr %s145, 8
      %s147 = scalar_lea.vmem %s0, %s146
      %p148 = pneg %p35
      %p149 = pneg %p32
      %p150 = pneg %p56
      %p151 = pneg %p53
      %p152 = pneg %p77
      %p153 = pneg %p74
      %p154 = pneg %p103
      %p155 = pneg %p100
      %p156 = scmp.lt.s32.totalorder %s14, 1
      %s157 = scalar_select %p156, %s14, 1
      %s158 = smul.addr %s157, 4
      %s159 = scalar_lea.vmem %s3, %s158
      %p160 = scmp.lt.s32.totalorder %s14, 1
      %s161 = scalar_select %p160, %s14, 1
      %s162 = smul.addr %s161, 3
      %s163 = smul.addr %s162, 8
      %s164 = scalar_lea.vmem %s0, %s163
      %p165 = scmp.lt.s32.totalorder %s14, 1
      %s166 = scalar_select %p165, %s14, 1
      %s167 = smul.addr %s166, 4
      %s168 = scalar_lea.vmem %s3, %s167
      %v169 = vld [vmem:[%s164] sm:$0xff]
      %v170 = vld [vmem:[%s164 + $0x8] sm:$0xff]
      %v171 = vld [vmem:[%s164 + $0x10] sm:$0xf]
      %v172 = vld [vmem:[%s1] sm:$0xff]
      %v173 = vld [vmem:[%s1 + $0x8] sm:$0xff]
      %v174 = vld [vmem:[%s1 + $0x10] sm:$0xff]
      %v175 = vld [vmem:[%s1 + $0x18] sm:$0xff]
      %v176 = vld [vmem:[%s1 + $0x20] sm:$0xff]
      %v177 = vld [vmem:[%s1 + $0x28] sm:$0xff]
      %v178 = vld [vmem:[%s1 + $0x30] sm:$0xff]
      %v179 = vld [vmem:[%s1 + $0x38] sm:$0xff]
      %v180 = vld [vmem:[%s1 + $0x40] sm:$0xff]
      %v181 = vld [vmem:[%s1 + $0x48] sm:$0xff]
      %v182 = vld [vmem:[%s1 + $0x50] sm:$0xff]
      %v183 = vld [vmem:[%s1 + $0x58] sm:$0xff]
      %v184 = vld [vmem:[%s1 + $0x60] sm:$0xff]
      %v185 = vld [vmem:[%s1 + $0x68] sm:$0xff]
      %v186 = vld [vmem:[%s1 + $0x70] sm:$0xff]
      %v187 = vld [vmem:[%s1 + $0x78] sm:$0xff]
      %v188 = vld [vmem:[%s1 + $0x80] sm:$0xff]
      %v189 = vld [vmem:[%s1 + $0x88] sm:$0xff]
      %v190 = vld [vmem:[%s1 + $0x90] sm:$0xff]
      %v191 = vld [vmem:[%s1 + $0x98] sm:$0xff]
      %v192 = vld [vmem:[%s1 + $0xa0] sm:$0xff]
      %v193 = vld [vmem:[%s1 + $0xa8] sm:$0xff]
      %v194 = vld [vmem:[%s1 + $0xb0] sm:$0xff]
      %v195 = vld [vmem:[%s1 + $0xb8] sm:$0xff]
      %v196 = vld [vmem:[%s2] sm:$0xff]
      %v197 = vld [vmem:[%s2 + $0x8] sm:$0xff]
      %199 = vset.pattern.permute.xlu0 0
      %200 = vperm.xlu0 %199, %v169
      %v201 = vpop.permute.xlu0 %200
      %204 = vset.pattern.permute.xlu0 0
      %205 = vperm.xlu0 %204, %v170
      %v206 = vpop.permute.xlu0 %205
      %209 = vset.pattern.permute.xlu0 0
      %210 = vperm.xlu0 %209, %v171
      %v211 = vpop.permute.xlu0 %210
      %v213 = vperm.slane %v196, 0
      %v214 = vmul.f32 %v201, %v213
      %v215 = vmul.f32 %v206, %v213
      %v216 = vmul.f32 %v211, %v213
      %v217 = vperm.slane %v196, 7
      %v218 = vadd.f32 %v214, %v217
      %v219 = vadd.f32 %v215, %v217
      %v220 = vadd.f32 %v216, %v217
      %221 = vset.pattern.permute.xlu0 1
      %222 = vperm.xlu0 %221, %v169
      %v223 = vpop.permute.xlu0 %222
      %225 = vset.pattern.permute.xlu0 1
      %226 = vperm.xlu0 %225, %v170
      %v227 = vpop.permute.xlu0 %226
      %229 = vset.pattern.permute.xlu0 1
      %230 = vperm.xlu0 %229, %v171
      %v231 = vpop.permute.xlu0 %230
      %v233 = vperm.slane %v196, 1
      %v234 = vmul.f32 %v223, %v233
      %v235 = vmul.f32 %v227, %v233
      %v236 = vmul.f32 %v231, %v233
      %v237 = vadd.f32 %v218, %v234
      %v238 = vadd.f32 %v219, %v235
      %v239 = vadd.f32 %v220, %v236
      %240 = vset.pattern.permute.xlu0 2
      %241 = vperm.xlu0 %240, %v169
      %v242 = vpop.permute.xlu0 %241
      %244 = vset.pattern.permute.xlu0 2
      %245 = vperm.xlu0 %244, %v170
      %v246 = vpop.permute.xlu0 %245
      %248 = vset.pattern.permute.xlu0 2
      %249 = vperm.xlu0 %248, %v171
      %v250 = vpop.permute.xlu0 %249
      %v252 = vperm.slane %v196, 2
      %v253 = vmul.f32 %v242, %v252
      %v254 = vmul.f32 %v246, %v252
      %v255 = vmul.f32 %v250, %v252
      %v256 = vadd.f32 %v237, %v253
      %v257 = vadd.f32 %v238, %v254
      %v258 = vadd.f32 %v239, %v255
      %259 = vset.pattern.permute.xlu0 3
      %260 = vperm.xlu0 %259, %v169
      %v261 = vpop.permute.xlu0 %260
      %263 = vset.pattern.permute.xlu0 3
      %264 = vperm.xlu0 %263, %v170
      %v265 = vpop.permute.xlu0 %264
      %267 = vset.pattern.permute.xlu0 3
      %268 = vperm.xlu0 %267, %v171
      %v269 = vpop.permute.xlu0 %268
      %v271 = vperm.slane %v196, 3
      %v272 = vmul.f32 %v261, %v271
      %v273 = vmul.f32 %v265, %v271
      %v274 = vmul.f32 %v269, %v271
      %v275 = vadd.f32 %v256, %v272
      %v276 = vadd.f32 %v257, %v273
      %v277 = vadd.f32 %v258, %v274
      %278 = vset.pattern.permute.xlu0 4
      %279 = vperm.xlu0 %278, %v169
      %v280 = vpop.permute.xlu0 %279
      %282 = vset.pattern.permute.xlu0 4
      %283 = vperm.xlu0 %282, %v170
      %v284 = vpop.permute.xlu0 %283
      %286 = vset.pattern.permute.xlu0 4
      %287 = vperm.xlu0 %286, %v171
      %v288 = vpop.permute.xlu0 %287
      %v290 = vperm.slane %v196, 4
      %v291 = vmul.f32 %v280, %v290
      %v292 = vmul.f32 %v284, %v290
      %v293 = vmul.f32 %v288, %v290
      %v294 = vadd.f32 %v275, %v291
      %v295 = vadd.f32 %v276, %v292
      %v296 = vadd.f32 %v277, %v293
      %297 = vset.pattern.permute.xlu0 5
      %298 = vperm.xlu0 %297, %v169
      %v299 = vpop.permute.xlu0 %298
      %301 = vset.pattern.permute.xlu0 5
      %302 = vperm.xlu0 %301, %v170
      %v303 = vpop.permute.xlu0 %302
      %305 = vset.pattern.permute.xlu0 5
      %306 = vperm.xlu0 %305, %v171
      %v307 = vpop.permute.xlu0 %306
      %v309 = vperm.slane %v196, 5
      %v310 = vmul.f32 %v299, %v309
      %v311 = vmul.f32 %v303, %v309
      %v312 = vmul.f32 %v307, %v309
      %v313 = vadd.f32 %v294, %v310
      %v314 = vadd.f32 %v295, %v311
      %v315 = vadd.f32 %v296, %v312
      %316 = vset.pattern.permute.xlu0 6
      %317 = vperm.xlu0 %316, %v169
      %v318 = vpop.permute.xlu0 %317
      %320 = vset.pattern.permute.xlu0 6
      %321 = vperm.xlu0 %320, %v170
      %v322 = vpop.permute.xlu0 %321
      %324 = vset.pattern.permute.xlu0 6
      %325 = vperm.xlu0 %324, %v171
      %v326 = vpop.permute.xlu0 %325
      %v328 = vperm.slane %v196, 6
      %v329 = vmul.f32 %v318, %v328
      %v330 = vmul.f32 %v322, %v328
      %v331 = vmul.f32 %v326, %v328
      %v332 = vadd.f32 %v313, %v329
      %v333 = vadd.f32 %v314, %v330
      %v334 = vadd.f32 %v315, %v331
      %vm338 = vcmask 1040384
      %v339 = vrot.slane %v332, 7
      %v340 = vrot.slane %v333, 7
      %v341 = vsel %vm338, %v339, %v340
      %v342 = vrot.slane %v334, 7
      %v343 = vsel %vm338, %v340, %v342
      %v345 = vsel %vm338, 0.0, %v339
      %vm346 = vcmask 1046528
      %v347 = vrot.slane %v332, 1
      %v348 = vrot.slane %v333, 1
      %v349 = vsel %vm346, %v347, %v348
      %v350 = vrot.slane %v334, 1
      %v351 = vsel %vm346, %v348, %v350
      %vm353 = vcmask 1042432
      %v354 = vsel %vm353, %v350, 0.0
      %vm355 = vcmask 523264
      %v356 = vsel %vm355, %v332, 0
      %v358 = vsel %vm355, %v333, 0
      %v360 = vsel %vm355, %v334, 0
      %362 = vmatpush.msra.mxu0 0.0
      %363 = vmatpush.msra.mxu0 0.0
      %364 = vmatpush.msra.mxu0 0.0
      %365 = vmatpush.msra.mxu0 0.0
      %366 = vmatpush.msra.mxu0 0.0
      %367 = vmatpush.msra.mxu0 0.0
      %368 = vmatpush.msra.mxu0 0.0
      %369 = vmatpush.msra.mxu0 0.0
      %370 = vmatpush.msra.mxu0 %v187
      %371 = vmatpush.msra.mxu0 %v186
      %372 = vmatpush.msra.mxu0 %v185
      %373 = vmatpush.msra.mxu0 %v184
      %374 = vmatpush.msra.mxu0 %v183
      %375 = vmatpush.msra.mxu0 %v182
      %376 = vmatpush.msra.mxu0 %v181
      %377 = vmatpush.msra.mxu0 %v180
      %378 = vmatmul.f32.gmra.mxu0 %v356
      %v379 = vpop.f32.mrf.mxu0
      %v380 = vadd.f32 0.0, %v379
      %381 = vmatmul.f32.gmra.mxu0 %v358
      %v382 = vpop.f32.mrf.mxu0
      %v383 = vadd.f32 0.0, %v382
      %384 = vmatmul.f32.gmra.mxu0 %v360
      %v385 = vpop.f32.mrf.mxu0
      %v386 = vadd.f32 0.0, %v385
      %387 = vdwg.mxu0
      %v389 = vsel %vm355, %v345, 0
      %v391 = vsel %vm355, %v341, 0
      %v393 = vsel %vm355, %v343, 0
      %395 = vmatpush.msra.mxu0 0.0
      %396 = vmatpush.msra.mxu0 0.0
      %397 = vmatpush.msra.mxu0 0.0
      %398 = vmatpush.msra.mxu0 0.0
      %399 = vmatpush.msra.mxu0 0.0
      %400 = vmatpush.msra.mxu0 0.0
      %401 = vmatpush.msra.mxu0 0.0
      %402 = vmatpush.msra.mxu0 0.0
      %403 = vmatpush.msra.mxu0 %v179
      %404 = vmatpush.msra.mxu0 %v178
      %405 = vmatpush.msra.mxu0 %v177
      %406 = vmatpush.msra.mxu0 %v176
      %407 = vmatpush.msra.mxu0 %v175
      %408 = vmatpush.msra.mxu0 %v174
      %409 = vmatpush.msra.mxu0 %v173
      %410 = vmatpush.msra.mxu0 %v172
      %411 = vmatmul.f32.gmra.mxu0 %v389
      %v412 = vpop.f32.mrf.mxu0
      %v413 = vadd.f32 %v380, %v412
      %414 = vmatmul.f32.gmra.mxu0 %v391
      %v415 = vpop.f32.mrf.mxu0
      %v416 = vadd.f32 %v383, %v415
      %417 = vmatmul.f32.gmra.mxu0 %v393
      %v418 = vpop.f32.mrf.mxu0
      %v419 = vadd.f32 %v386, %v418
      %420 = vdwg.mxu0
      %v421 = vsel %vm355, %v349, 0
      %v423 = vsel %vm355, %v351, 0
      %v426 = vsel %vm355, %v354, 0
      %428 = vmatpush.msra.mxu0 0.0
      %429 = vmatpush.msra.mxu0 0.0
      %430 = vmatpush.msra.mxu0 0.0
      %431 = vmatpush.msra.mxu0 0.0
      %432 = vmatpush.msra.mxu0 0.0
      %433 = vmatpush.msra.mxu0 0.0
      %434 = vmatpush.msra.mxu0 0.0
      %435 = vmatpush.msra.mxu0 0.0
      %436 = vmatpush.msra.mxu0 %v195
      %437 = vmatpush.msra.mxu0 %v194
      %438 = vmatpush.msra.mxu0 %v193
      %439 = vmatpush.msra.mxu0 %v192
      %440 = vmatpush.msra.mxu0 %v191
      %441 = vmatpush.msra.mxu0 %v190
      %442 = vmatpush.msra.mxu0 %v189
      %443 = vmatpush.msra.mxu0 %v188
      %444 = vmatmul.f32.gmra.mxu0 %v421
      %v445 = vpop.f32.mrf.mxu0
      %v446 = vadd.f32 0.0, %v445
      %447 = vmatmul.f32.gmra.mxu0 %v423
      %v448 = vpop.f32.mrf.mxu0
      %v449 = vadd.f32 0.0, %v448
      %450 = vmatmul.f32.gmra.mxu0 %v426
      %v451 = vpop.f32.mrf.mxu0
      %v452 = vadd.f32 0.0, %v451
      %453 = vdwg.mxu0
      %v454 = vadd.f32 %v413, %v446
      %v455 = vadd.f32 %v416, %v449
      %v456 = vadd.f32 %v419, %v452
      %v457 = vperm.slane %v197, 0
      %v458 = vadd.f32 %v454, %v457
      %v459 = vadd.f32 %v455, %v457
      %v460 = vadd.f32 %v456, %v457
      %v461 = vmax.f32 %v458, 0.0
      %v462 = vmax.f32 %v459, 0.0
      %v463 = vmax.f32 %v460, 0.0
      %v467 = vrot.slane %v461, 7
      %v468 = vrot.slane %v462, 7
      %v469 = vsel %vm338, %v467, %v468
      %v470 = vrot.slane %v463, 7
      %v471 = vsel %vm338, %v468, %v470
      %v473 = vsel %vm338, 0.0, %v467
      %v474 = vrot.slane %v461, 1
      %v475 = vrot.slane %v462, 1
      %v476 = vsel %vm346, %v474, %v475
      %v477 = vrot.slane %v463, 1
      %v478 = vsel %vm346, %v475, %v477
      %v480 = vsel %vm353, %v477, 0.0
      %v481 = vsel %vm355, %v461, 0
      %v483 = vsel %vm355, %v462, 0
      %v485 = vsel %vm355, %v463, 0
      %487 = vmatpush.msra.mxu0 0.0
      %488 = vmatpush.msra.mxu0 0.0
      %489 = vmatpush.msra.mxu0 0.0
      %490 = vmatpush.msra.mxu0 0.0
      %491 = vmatpush.msra.mxu0 0.0
      %492 = vmatpush.msra.mxu0 0.0
      %493 = vmatpush.msra.mxu0 0.0
      %494 = vmatpush.msra.mxu0 0.0
      %495 = vmatpush.msra.mxu0 %v187
      %496 = vmatpush.msra.mxu0 %v186
      %497 = vmatpush.msra.mxu0 %v185
      %498 = vmatpush.msra.mxu0 %v184
      %499 = vmatpush.msra.mxu0 %v183
      %500 = vmatpush.msra.mxu0 %v182
      %501 = vmatpush.msra.mxu0 %v181
      %502 = vmatpush.msra.mxu0 %v180
      %503 = vmatmul.f32.gmra.mxu0 %v481
      %v504 = vpop.f32.mrf.mxu0
      %v505 = vadd.f32 0.0, %v504
      %506 = vmatmul.f32.gmra.mxu0 %v483
      %v507 = vpop.f32.mrf.mxu0
      %v508 = vadd.f32 0.0, %v507
      %509 = vmatmul.f32.gmra.mxu0 %v485
      %v510 = vpop.f32.mrf.mxu0
      %v511 = vadd.f32 0.0, %v510
      %512 = vdwg.mxu0
      %v514 = vsel %vm355, %v473, 0
      %v516 = vsel %vm355, %v469, 0
      %v518 = vsel %vm355, %v471, 0
      %520 = vmatpush.msra.mxu0 0.0
      %521 = vmatpush.msra.mxu0 0.0
      %522 = vmatpush.msra.mxu0 0.0
      %523 = vmatpush.msra.mxu0 0.0
      %524 = vmatpush.msra.mxu0 0.0
      %525 = vmatpush.msra.mxu0 0.0
      %526 = vmatpush.msra.mxu0 0.0
      %527 = vmatpush.msra.mxu0 0.0
      %528 = vmatpush.msra.mxu0 %v179
      %529 = vmatpush.msra.mxu0 %v178
      %530 = vmatpush.msra.mxu0 %v177
      %531 = vmatpush.msra.mxu0 %v176
      %532 = vmatpush.msra.mxu0 %v175
      %533 = vmatpush.msra.mxu0 %v174
      %534 = vmatpush.msra.mxu0 %v173
      %535 = vmatpush.msra.mxu0 %v172
      %536 = vmatmul.f32.gmra.mxu0 %v514
      %v537 = vpop.f32.mrf.mxu0
      %v538 = vadd.f32 %v505, %v537
      %539 = vmatmul.f32.gmra.mxu0 %v516
      %v540 = vpop.f32.mrf.mxu0
      %v541 = vadd.f32 %v508, %v540
      %542 = vmatmul.f32.gmra.mxu0 %v518
      %v543 = vpop.f32.mrf.mxu0
      %v544 = vadd.f32 %v511, %v543
      %545 = vdwg.mxu0
      %v546 = vsel %vm355, %v476, 0
      %v548 = vsel %vm355, %v478, 0
      %v551 = vsel %vm355, %v480, 0
      %553 = vmatpush.msra.mxu0 0.0
      %554 = vmatpush.msra.mxu0 0.0
      %555 = vmatpush.msra.mxu0 0.0
      %556 = vmatpush.msra.mxu0 0.0
      %557 = vmatpush.msra.mxu0 0.0
      %558 = vmatpush.msra.mxu0 0.0
      %559 = vmatpush.msra.mxu0 0.0
      %560 = vmatpush.msra.mxu0 0.0
      %561 = vmatpush.msra.mxu0 %v195
      %562 = vmatpush.msra.mxu0 %v194
      %563 = vmatpush.msra.mxu0 %v193
      %564 = vmatpush.msra.mxu0 %v192
      %565 = vmatpush.msra.mxu0 %v191
      %566 = vmatpush.msra.mxu0 %v190
      %567 = vmatpush.msra.mxu0 %v189
      %568 = vmatpush.msra.mxu0 %v188
      %569 = vmatmul.f32.gmra.mxu0 %v546
      %v570 = vpop.f32.mrf.mxu0
      %v571 = vadd.f32 0.0, %v570
      %572 = vmatmul.f32.gmra.mxu0 %v548
      %v573 = vpop.f32.mrf.mxu0
      %v574 = vadd.f32 0.0, %v573
      %575 = vmatmul.f32.gmra.mxu0 %v551
      %v576 = vpop.f32.mrf.mxu0
      %v577 = vadd.f32 0.0, %v576
      %578 = vdwg.mxu0
      %v579 = vadd.f32 %v538, %v571
      %v580 = vadd.f32 %v541, %v574
      %v581 = vadd.f32 %v544, %v577
      %v582 = vadd.f32 %v579, %v457
      %v583 = vadd.f32 %v580, %v457
      %v584 = vadd.f32 %v581, %v457
      %v585 = vadd.f32 %v582, %v332
      %v586 = vadd.f32 %v583, %v333
      %v587 = vadd.f32 %v584, %v334
      %v588 = vmax.f32 %v585, 0.0
      %v589 = vmax.f32 %v586, 0.0
      %v590 = vmax.f32 %v587, 0.0
      %v594 = vrot.slane %v588, 7
      %v595 = vrot.slane %v589, 7
      %v596 = vsel %vm338, %v594, %v595
      %v597 = vrot.slane %v590, 7
      %v598 = vsel %vm338, %v595, %v597
      %v600 = vsel %vm338, 0.0, %v594
      %v601 = vrot.slane %v588, 1
      %v602 = vrot.slane %v589, 1
      %v603 = vsel %vm346, %v601, %v602
      %v604 = vrot.slane %v590, 1
      %v605 = vsel %vm346, %v602, %v604
      %v607 = vsel %vm353, %v604, 0.0
      %v608 = vsel %vm355, %v588, 0
      %v610 = vsel %vm355, %v589, 0
      %v612 = vsel %vm355, %v590, 0
      %614 = vmatpush.msra.mxu0 0.0
      %615 = vmatpush.msra.mxu0 0.0
      %616 = vmatpush.msra.mxu0 0.0
      %617 = vmatpush.msra.mxu0 0.0
      %618 = vmatpush.msra.mxu0 0.0
      %619 = vmatpush.msra.mxu0 0.0
      %620 = vmatpush.msra.mxu0 0.0
      %621 = vmatpush.msra.mxu0 0.0
      %622 = vmatpush.msra.mxu0 %v187
      %623 = vmatpush.msra.mxu0 %v186
      %624 = vmatpush.msra.mxu0 %v185
      %625 = vmatpush.msra.mxu0 %v184
      %626 = vmatpush.msra.mxu0 %v183
      %627 = vmatpush.msra.mxu0 %v182
      %628 = vmatpush.msra.mxu0 %v181
      %629 = vmatpush.msra.mxu0 %v180
      %630 = vmatmul.f32.gmra.mxu0 %v608
      %v631 = vpop.f32.mrf.mxu0
      %v632 = vadd.f32 0.0, %v631
      %633 = vmatmul.f32.gmra.mxu0 %v610
      %v634 = vpop.f32.mrf.mxu0
      %v635 = vadd.f32 0.0, %v634
      %636 = vmatmul.f32.gmra.mxu0 %v612
      %v637 = vpop.f32.mrf.mxu0
      %v638 = vadd.f32 0.0, %v637
      %639 = vdwg.mxu0
      %v641 = vsel %vm355, %v600, 0
      %v643 = vsel %vm355, %v596, 0
      %v645 = vsel %vm355, %v598, 0
      %647 = vmatpush.msra.mxu0 0.0
      %648 = vmatpush.msra.mxu0 0.0
      %649 = vmatpush.msra.mxu0 0.0
      %650 = vmatpush.msra.mxu0 0.0
      %651 = vmatpush.msra.mxu0 0.0
      %652 = vmatpush.msra.mxu0 0.0
      %653 = vmatpush.msra.mxu0 0.0
      %654 = vmatpush.msra.mxu0 0.0
      %655 = vmatpush.msra.mxu0 %v179
      %656 = vmatpush.msra.mxu0 %v178
      %657 = vmatpush.msra.mxu0 %v177
      %658 = vmatpush.msra.mxu0 %v176
      %659 = vmatpush.msra.mxu0 %v175
      %660 = vmatpush.msra.mxu0 %v174
      %661 = vmatpush.msra.mxu0 %v173
      %662 = vmatpush.msra.mxu0 %v172
      %663 = vmatmul.f32.gmra.mxu0 %v641
      %v664 = vpop.f32.mrf.mxu0
      %v665 = vadd.f32 %v632, %v664
      %666 = vmatmul.f32.gmra.mxu0 %v643
      %v667 = vpop.f32.mrf.mxu0
      %v668 = vadd.f32 %v635, %v667
      %669 = vmatmul.f32.gmra.mxu0 %v645
      %v670 = vpop.f32.mrf.mxu0
      %v671 = vadd.f32 %v638, %v670
      %672 = vdwg.mxu0
      %v673 = vsel %vm355, %v603, 0
      %v675 = vsel %vm355, %v605, 0
      %v678 = vsel %vm355, %v607, 0
      %680 = vmatpush.msra.mxu0 0.0
      %681 = vmatpush.msra.mxu0 0.0
      %682 = vmatpush.msra.mxu0 0.0
      %683 = vmatpush.msra.mxu0 0.0
      %684 = vmatpush.msra.mxu0 0.0
      %685 = vmatpush.msra.mxu0 0.0
      %686 = vmatpush.msra.mxu0 0.0
      %687 = vmatpush.msra.mxu0 0.0
      %688 = vmatpush.msra.mxu0 %v195
      %689 = vmatpush.msra.mxu0 %v194
      %690 = vmatpush.msra.mxu0 %v193
      %691 = vmatpush.msra.mxu0 %v192
      %692 = vmatpush.msra.mxu0 %v191
      %693 = vmatpush.msra.mxu0 %v190
      %694 = vmatpush.msra.mxu0 %v189
      %695 = vmatpush.msra.mxu0 %v188
      %696 = vmatmul.f32.gmra.mxu0 %v673
      %v697 = vpop.f32.mrf.mxu0
      %v698 = vadd.f32 0.0, %v697
      %699 = vmatmul.f32.gmra.mxu0 %v675
      %v700 = vpop.f32.mrf.mxu0
      %v701 = vadd.f32 0.0, %v700
      %702 = vmatmul.f32.gmra.mxu0 %v678
      %v703 = vpop.f32.mrf.mxu0
      %v704 = vadd.f32 0.0, %v703
      %705 = vdwg.mxu0
      %v706 = vadd.f32 %v665, %v698
      %v707 = vadd.f32 %v668, %v701
      %v708 = vadd.f32 %v671, %v704
      %v709 = vadd.f32 %v706, %v457
      %v710 = vadd.f32 %v707, %v457
      %v711 = vadd.f32 %v708, %v457
      %v712 = vmax.f32 %v709, 0.0
      %v713 = vmax.f32 %v710, 0.0
      %v714 = vmax.f32 %v711, 0.0
      %v718 = vrot.slane %v712, 7
      %v719 = vrot.slane %v713, 7
      %v720 = vsel %vm338, %v718, %v719
      %v721 = vrot.slane %v714, 7
      %v722 = vsel %vm338, %v719, %v721
      %v724 = vsel %vm338, 0.0, %v718
      %v725 = vrot.slane %v712, 1
      %v726 = vrot.slane %v713, 1
      %v727 = vsel %vm346, %v725, %v726
      %v728 = vrot.slane %v714, 1
      %v729 = vsel %vm346, %v726, %v728
      %v731 = vsel %vm353, %v728, 0.0
      %v732 = vsel %vm355, %v712, 0
      %v734 = vsel %vm355, %v713, 0
      %v736 = vsel %vm355, %v714, 0
      %738 = vmatpush.msra.mxu0 0.0
      %739 = vmatpush.msra.mxu0 0.0
      %740 = vmatpush.msra.mxu0 0.0
      %741 = vmatpush.msra.mxu0 0.0
      %742 = vmatpush.msra.mxu0 0.0
      %743 = vmatpush.msra.mxu0 0.0
      %744 = vmatpush.msra.mxu0 0.0
      %745 = vmatpush.msra.mxu0 0.0
      %746 = vmatpush.msra.mxu0 %v187
      %747 = vmatpush.msra.mxu0 %v186
      %748 = vmatpush.msra.mxu0 %v185
      %749 = vmatpush.msra.mxu0 %v184
      %750 = vmatpush.msra.mxu0 %v183
      %751 = vmatpush.msra.mxu0 %v182
      %752 = vmatpush.msra.mxu0 %v181
      %753 = vmatpush.msra.mxu0 %v180
      %754 = vmatmul.f32.gmra.mxu0 %v732
      %v755 = vpop.f32.mrf.mxu0
      %v756 = vadd.f32 0.0, %v755
      %757 = vmatmul.f32.gmra.mxu0 %v734
      %v758 = vpop.f32.mrf.mxu0
      %v759 = vadd.f32 0.0, %v758
      %760 = vmatmul.f32.gmra.mxu0 %v736
      %v761 = vpop.f32.mrf.mxu0
      %v762 = vadd.f32 0.0, %v761
      %763 = vdwg.mxu0
      %v765 = vsel %vm355, %v724, 0
      %v767 = vsel %vm355, %v720, 0
      %v769 = vsel %vm355, %v722, 0
      %771 = vmatpush.msra.mxu0 0.0
      %772 = vmatpush.msra.mxu0 0.0
      %773 = vmatpush.msra.mxu0 0.0
      %774 = vmatpush.msra.mxu0 0.0
      %775 = vmatpush.msra.mxu0 0.0
      %776 = vmatpush.msra.mxu0 0.0
      %777 = vmatpush.msra.mxu0 0.0
      %778 = vmatpush.msra.mxu0 0.0
      %779 = vmatpush.msra.mxu0 %v179
      %780 = vmatpush.msra.mxu0 %v178
      %781 = vmatpush.msra.mxu0 %v177
      %782 = vmatpush.msra.mxu0 %v176
      %783 = vmatpush.msra.mxu0 %v175
      %784 = vmatpush.msra.mxu0 %v174
      %785 = vmatpush.msra.mxu0 %v173
      %786 = vmatpush.msra.mxu0 %v172
      %787 = vmatmul.f32.gmra.mxu0 %v765
      %v788 = vpop.f32.mrf.mxu0
      %v789 = vadd.f32 %v756, %v788
      %790 = vmatmul.f32.gmra.mxu0 %v767
      %v791 = vpop.f32.mrf.mxu0
      %v792 = vadd.f32 %v759, %v791
      %793 = vmatmul.f32.gmra.mxu0 %v769
      %v794 = vpop.f32.mrf.mxu0
      %v795 = vadd.f32 %v762, %v794
      %796 = vdwg.mxu0
      %v797 = vsel %vm355, %v727, 0
      %v799 = vsel %vm355, %v729, 0
      %v802 = vsel %vm355, %v731, 0
      %804 = vmatpush.msra.mxu0 0.0
      %805 = vmatpush.msra.mxu0 0.0
      %806 = vmatpush.msra.mxu0 0.0
      %807 = vmatpush.msra.mxu0 0.0
      %808 = vmatpush.msra.mxu0 0.0
      %809 = vmatpush.msra.mxu0 0.0
      %810 = vmatpush.msra.mxu0 0.0
      %811 = vmatpush.msra.mxu0 0.0
      %812 = vmatpush.msra.mxu0 %v195
      %813 = vmatpush.msra.mxu0 %v194
      %814 = vmatpush.msra.mxu0 %v193
      %815 = vmatpush.msra.mxu0 %v192
      %816 = vmatpush.msra.mxu0 %v191
      %817 = vmatpush.msra.mxu0 %v190
      %818 = vmatpush.msra.mxu0 %v189
      %819 = vmatpush.msra.mxu0 %v188
      %820 = vmatmul.f32.gmra.mxu0 %v797
      %v821 = vpop.f32.mrf.mxu0
      %v822 = vadd.f32 0.0, %v821
      %823 = vmatmul.f32.gmra.mxu0 %v799
      %v824 = vpop.f32.mrf.mxu0
      %v825 = vadd.f32 0.0, %v824
      %826 = vmatmul.f32.gmra.mxu0 %v802
      %v827 = vpop.f32.mrf.mxu0
      %v828 = vadd.f32 0.0, %v827
      %829 = vdwg.mxu0
      %v830 = vadd.f32 %v789, %v822
      %v831 = vadd.f32 %v792, %v825
      %v832 = vadd.f32 %v795, %v828
      %v833 = vadd.f32 %v830, %v457
      %v834 = vadd.f32 %v831, %v457
      %v835 = vadd.f32 %v832, %v457
      %v836 = vadd.f32 %v833, %v588
      %v837 = vadd.f32 %v834, %v589
      %v838 = vadd.f32 %v835, %v590
      %v839 = vmax.f32 %v836, 0.0
      %v840 = vmax.f32 %v837, 0.0
      %v841 = vmax.f32 %v838, 0.0
      %v845 = vrot.slane %v839, 7
      %v846 = vrot.slane %v840, 7
      %v847 = vsel %vm338, %v845, %v846
      %v848 = vrot.slane %v841, 7
      %v849 = vsel %vm338, %v846, %v848
      %v851 = vsel %vm338, 0.0, %v845
      %v852 = vrot.slane %v839, 1
      %v853 = vrot.slane %v840, 1
      %v854 = vsel %vm346, %v852, %v853
      %v855 = vrot.slane %v841, 1
      %v856 = vsel %vm346, %v853, %v855
      %v858 = vsel %vm353, %v855, 0.0
      %v859 = vsel %vm355, %v839, 0
      %v861 = vsel %vm355, %v840, 0
      %v863 = vsel %vm355, %v841, 0
      %865 = vmatpush.msra.mxu0 0.0
      %866 = vmatpush.msra.mxu0 0.0
      %867 = vmatpush.msra.mxu0 0.0
      %868 = vmatpush.msra.mxu0 0.0
      %869 = vmatpush.msra.mxu0 0.0
      %870 = vmatpush.msra.mxu0 0.0
      %871 = vmatpush.msra.mxu0 0.0
      %872 = vmatpush.msra.mxu0 0.0
      %873 = vmatpush.msra.mxu0 %v187
      %874 = vmatpush.msra.mxu0 %v186
      %875 = vmatpush.msra.mxu0 %v185
      %876 = vmatpush.msra.mxu0 %v184
      %877 = vmatpush.msra.mxu0 %v183
      %878 = vmatpush.msra.mxu0 %v182
      %879 = vmatpush.msra.mxu0 %v181
      %880 = vmatpush.msra.mxu0 %v180
      %881 = vmatmul.f32.gmra.mxu0 %v859
      %v882 = vpop.f32.mrf.mxu0
      %v883 = vadd.f32 0.0, %v882
      %884 = vmatmul.f32.gmra.mxu0 %v861
      %v885 = vpop.f32.mrf.mxu0
      %v886 = vadd.f32 0.0, %v885
      %887 = vmatmul.f32.gmra.mxu0 %v863
      %v888 = vpop.f32.mrf.mxu0
      %v889 = vadd.f32 0.0, %v888
      %890 = vdwg.mxu0
      %v892 = vsel %vm355, %v851, 0
      %v894 = vsel %vm355, %v847, 0
      %v896 = vsel %vm355, %v849, 0
      %898 = vmatpush.msra.mxu0 0.0
      %899 = vmatpush.msra.mxu0 0.0
      %900 = vmatpush.msra.mxu0 0.0
      %901 = vmatpush.msra.mxu0 0.0
      %902 = vmatpush.msra.mxu0 0.0
      %903 = vmatpush.msra.mxu0 0.0
      %904 = vmatpush.msra.mxu0 0.0
      %905 = vmatpush.msra.mxu0 0.0
      %906 = vmatpush.msra.mxu0 %v179
      %907 = vmatpush.msra.mxu0 %v178
      %908 = vmatpush.msra.mxu0 %v177
      %909 = vmatpush.msra.mxu0 %v176
      %910 = vmatpush.msra.mxu0 %v175
      %911 = vmatpush.msra.mxu0 %v174
      %912 = vmatpush.msra.mxu0 %v173
      %913 = vmatpush.msra.mxu0 %v172
      %914 = vmatmul.f32.gmra.mxu0 %v892
      %v915 = vpop.f32.mrf.mxu0
      %v916 = vadd.f32 %v883, %v915
      %917 = vmatmul.f32.gmra.mxu0 %v894
      %v918 = vpop.f32.mrf.mxu0
      %v919 = vadd.f32 %v886, %v918
      %920 = vmatmul.f32.gmra.mxu0 %v896
      %v921 = vpop.f32.mrf.mxu0
      %v922 = vadd.f32 %v889, %v921
      %923 = vdwg.mxu0
      %v924 = vsel %vm355, %v854, 0
      %v926 = vsel %vm355, %v856, 0
      %v929 = vsel %vm355, %v858, 0
      %931 = vmatpush.msra.mxu0 0.0
      %932 = vmatpush.msra.mxu0 0.0
      %933 = vmatpush.msra.mxu0 0.0
      %934 = vmatpush.msra.mxu0 0.0
      %935 = vmatpush.msra.mxu0 0.0
      %936 = vmatpush.msra.mxu0 0.0
      %937 = vmatpush.msra.mxu0 0.0
      %938 = vmatpush.msra.mxu0 0.0
      %939 = vmatpush.msra.mxu0 %v195
      %940 = vmatpush.msra.mxu0 %v194
      %941 = vmatpush.msra.mxu0 %v193
      %942 = vmatpush.msra.mxu0 %v192
      %943 = vmatpush.msra.mxu0 %v191
      %944 = vmatpush.msra.mxu0 %v190
      %945 = vmatpush.msra.mxu0 %v189
      %946 = vmatpush.msra.mxu0 %v188
      %947 = vmatmul.f32.gmra.mxu0 %v924
      %v948 = vpop.f32.mrf.mxu0
      %v949 = vadd.f32 0.0, %v948
      %950 = vmatmul.f32.gmra.mxu0 %v926
      %v951 = vpop.f32.mrf.mxu0
      %v952 = vadd.f32 0.0, %v951
      %953 = vmatmul.f32.gmra.mxu0 %v929
      %v954 = vpop.f32.mrf.mxu0
      %v955 = vadd.f32 0.0, %v954
      %956 = vdwg.mxu0
      %v957 = vadd.f32 %v916, %v949
      %v958 = vadd.f32 %v919, %v952
      %v959 = vadd.f32 %v922, %v955
      %v960 = vadd.f32 %v957, %v457
      %v961 = vadd.f32 %v958, %v457
      %v962 = vadd.f32 %v959, %v457
      %v963 = vmax.f32 %v960, 0.0
      %v964 = vmax.f32 %v961, 0.0
      %v965 = vmax.f32 %v962, 0.0
      %v969 = vrot.slane %v963, 7
      %v970 = vrot.slane %v964, 7
      %v971 = vsel %vm338, %v969, %v970
      %v972 = vrot.slane %v965, 7
      %v973 = vsel %vm338, %v970, %v972
      %v975 = vsel %vm338, 0.0, %v969
      %v976 = vrot.slane %v963, 1
      %v977 = vrot.slane %v964, 1
      %v978 = vsel %vm346, %v976, %v977
      %v979 = vrot.slane %v965, 1
      %v980 = vsel %vm346, %v977, %v979
      %v982 = vsel %vm353, %v979, 0.0
      %v983 = vsel %vm355, %v963, 0
      %v985 = vsel %vm355, %v964, 0
      %v987 = vsel %vm355, %v965, 0
      %989 = vmatpush.msra.mxu0 0.0
      %990 = vmatpush.msra.mxu0 0.0
      %991 = vmatpush.msra.mxu0 0.0
      %992 = vmatpush.msra.mxu0 0.0
      %993 = vmatpush.msra.mxu0 0.0
      %994 = vmatpush.msra.mxu0 0.0
      %995 = vmatpush.msra.mxu0 0.0
      %996 = vmatpush.msra.mxu0 0.0
      %997 = vmatpush.msra.mxu0 %v187
      %998 = vmatpush.msra.mxu0 %v186
      %999 = vmatpush.msra.mxu0 %v185
      %1000 = vmatpush.msra.mxu0 %v184
      %1001 = vmatpush.msra.mxu0 %v183
      %1002 = vmatpush.msra.mxu0 %v182
      %1003 = vmatpush.msra.mxu0 %v181
      %1004 = vmatpush.msra.mxu0 %v180
      %1005 = vmatmul.f32.gmra.mxu0 %v983
      %v1006 = vpop.f32.mrf.mxu0
      %v1007 = vadd.f32 0.0, %v1006
      %1008 = vmatmul.f32.gmra.mxu0 %v985
      %v1009 = vpop.f32.mrf.mxu0
      %v1010 = vadd.f32 0.0, %v1009
      %1011 = vmatmul.f32.gmra.mxu0 %v987
      %v1012 = vpop.f32.mrf.mxu0
      %v1013 = vadd.f32 0.0, %v1012
      %1014 = vdwg.mxu0
      %v1016 = vsel %vm355, %v975, 0
      %v1018 = vsel %vm355, %v971, 0
      %v1020 = vsel %vm355, %v973, 0
      %1022 = vmatpush.msra.mxu0 0.0
      %1023 = vmatpush.msra.mxu0 0.0
      %1024 = vmatpush.msra.mxu0 0.0
      %1025 = vmatpush.msra.mxu0 0.0
      %1026 = vmatpush.msra.mxu0 0.0
      %1027 = vmatpush.msra.mxu0 0.0
      %1028 = vmatpush.msra.mxu0 0.0
      %1029 = vmatpush.msra.mxu0 0.0
      %1030 = vmatpush.msra.mxu0 %v179
      %1031 = vmatpush.msra.mxu0 %v178
      %1032 = vmatpush.msra.mxu0 %v177
      %1033 = vmatpush.msra.mxu0 %v176
      %1034 = vmatpush.msra.mxu0 %v175
      %1035 = vmatpush.msra.mxu0 %v174
      %1036 = vmatpush.msra.mxu0 %v173
      %1037 = vmatpush.msra.mxu0 %v172
      %1038 = vmatmul.f32.gmra.mxu0 %v1016
      %v1039 = vpop.f32.mrf.mxu0
      %v1040 = vadd.f32 %v1007, %v1039
      %1041 = vmatmul.f32.gmra.mxu0 %v1018
      %v1042 = vpop.f32.mrf.mxu0
      %v1043 = vadd.f32 %v1010, %v1042
      %1044 = vmatmul.f32.gmra.mxu0 %v1020
      %v1045 = vpop.f32.mrf.mxu0
      %v1046 = vadd.f32 %v1013, %v1045
      %1047 = vdwg.mxu0
      %v1048 = vsel %vm355, %v978, 0
      %v1050 = vsel %vm355, %v980, 0
      %v1053 = vsel %vm355, %v982, 0
      %1055 = vmatpush.msra.mxu0 0.0
      %1056 = vmatpush.msra.mxu0 0.0
      %1057 = vmatpush.msra.mxu0 0.0
      %1058 = vmatpush.msra.mxu0 0.0
      %1059 = vmatpush.msra.mxu0 0.0
      %1060 = vmatpush.msra.mxu0 0.0
      %1061 = vmatpush.msra.mxu0 0.0
      %1062 = vmatpush.msra.mxu0 0.0
      %1063 = vmatpush.msra.mxu0 %v195
      %1064 = vmatpush.msra.mxu0 %v194
      %1065 = vmatpush.msra.mxu0 %v193
      %1066 = vmatpush.msra.mxu0 %v192
      %1067 = vmatpush.msra.mxu0 %v191
      %1068 = vmatpush.msra.mxu0 %v190
      %1069 = vmatpush.msra.mxu0 %v189
      %1070 = vmatpush.msra.mxu0 %v188
      %1071 = vmatmul.f32.gmra.mxu0 %v1048
      %v1072 = vpop.f32.mrf.mxu0
      %v1073 = vadd.f32 0.0, %v1072
      %1074 = vmatmul.f32.gmra.mxu0 %v1050
      %v1075 = vpop.f32.mrf.mxu0
      %v1076 = vadd.f32 0.0, %v1075
      %1077 = vmatmul.f32.gmra.mxu0 %v1053
      %v1078 = vpop.f32.mrf.mxu0
      %v1079 = vadd.f32 0.0, %v1078
      %1080 = vdwg.mxu0
      %v1081 = vadd.f32 %v1040, %v1073
      %v1082 = vadd.f32 %v1043, %v1076
      %v1083 = vadd.f32 %v1046, %v1079
      %v1084 = vadd.f32 %v1081, %v457
      %v1085 = vadd.f32 %v1082, %v457
      %v1086 = vadd.f32 %v1083, %v457
      %v1087 = vadd.f32 %v1084, %v839
      %v1088 = vadd.f32 %v1085, %v840
      %v1089 = vadd.f32 %v1086, %v841
      %v1090 = vmax.f32 %v1087, 0.0
      %v1091 = vmax.f32 %v1088, 0.0
      %v1092 = vmax.f32 %v1089, 0.0
      %v1096 = vrot.slane %v1090, 7
      %v1097 = vrot.slane %v1091, 7
      %v1098 = vsel %vm338, %v1096, %v1097
      %v1099 = vrot.slane %v1092, 7
      %v1100 = vsel %vm338, %v1097, %v1099
      %v1102 = vsel %vm338, 0.0, %v1096
      %v1103 = vrot.slane %v1090, 1
      %v1104 = vrot.slane %v1091, 1
      %v1105 = vsel %vm346, %v1103, %v1104
      %v1106 = vrot.slane %v1092, 1
      %v1107 = vsel %vm346, %v1104, %v1106
      %v1109 = vsel %vm353, %v1106, 0.0
      %v1110 = vsel %vm355, %v1090, 0
      %v1112 = vsel %vm355, %v1091, 0
      %v1114 = vsel %vm355, %v1092, 0
      %1116 = vmatpush.msra.mxu0 0.0
      %1117 = vmatpush.msra.mxu0 0.0
      %1118 = vmatpush.msra.mxu0 0.0
      %1119 = vmatpush.msra.mxu0 0.0
      %1120 = vmatpush.msra.mxu0 0.0
      %1121 = vmatpush.msra.mxu0 0.0
      %1122 = vmatpush.msra.mxu0 0.0
      %1123 = vmatpush.msra.mxu0 0.0
      %1124 = vmatpush.msra.mxu0 %v187
      %1125 = vmatpush.msra.mxu0 %v186
      %1126 = vmatpush.msra.mxu0 %v185
      %1127 = vmatpush.msra.mxu0 %v184
      %1128 = vmatpush.msra.mxu0 %v183
      %1129 = vmatpush.msra.mxu0 %v182
      %1130 = vmatpush.msra.mxu0 %v181
      %1131 = vmatpush.msra.mxu0 %v180
      %1132 = vmatmul.f32.gmra.mxu0 %v1110
      %v1133 = vpop.f32.mrf.mxu0
      %v1134 = vadd.f32 0.0, %v1133
      %1135 = vmatmul.f32.gmra.mxu0 %v1112
      %v1136 = vpop.f32.mrf.mxu0
      %v1137 = vadd.f32 0.0, %v1136
      %1138 = vmatmul.f32.gmra.mxu0 %v1114
      %v1139 = vpop.f32.mrf.mxu0
      %v1140 = vadd.f32 0.0, %v1139
      %1141 = vdwg.mxu0
      %v1143 = vsel %vm355, %v1102, 0
      %v1145 = vsel %vm355, %v1098, 0
      %v1147 = vsel %vm355, %v1100, 0
      %1149 = vmatpush.msra.mxu0 0.0
      %1150 = vmatpush.msra.mxu0 0.0
      %1151 = vmatpush.msra.mxu0 0.0
      %1152 = vmatpush.msra.mxu0 0.0
      %1153 = vmatpush.msra.mxu0 0.0
      %1154 = vmatpush.msra.mxu0 0.0
      %1155 = vmatpush.msra.mxu0 0.0
      %1156 = vmatpush.msra.mxu0 0.0
      %1157 = vmatpush.msra.mxu0 %v179
      %1158 = vmatpush.msra.mxu0 %v178
      %1159 = vmatpush.msra.mxu0 %v177
      %1160 = vmatpush.msra.mxu0 %v176
      %1161 = vmatpush.msra.mxu0 %v175
      %1162 = vmatpush.msra.mxu0 %v174
      %1163 = vmatpush.msra.mxu0 %v173
      %1164 = vmatpush.msra.mxu0 %v172
      %1165 = vmatmul.f32.gmra.mxu0 %v1143
      %v1166 = vpop.f32.mrf.mxu0
      %v1167 = vadd.f32 %v1134, %v1166
      %1168 = vmatmul.f32.gmra.mxu0 %v1145
      %v1169 = vpop.f32.mrf.mxu0
      %v1170 = vadd.f32 %v1137, %v1169
      %1171 = vmatmul.f32.gmra.mxu0 %v1147
      %v1172 = vpop.f32.mrf.mxu0
      %v1173 = vadd.f32 %v1140, %v1172
      %1174 = vdwg.mxu0
      %v1175 = vsel %vm355, %v1105, 0
      %v1177 = vsel %vm355, %v1107, 0
      %v1180 = vsel %vm355, %v1109, 0
      %1182 = vmatpush.msra.mxu0 0.0
      %1183 = vmatpush.msra.mxu0 0.0
      %1184 = vmatpush.msra.mxu0 0.0
      %1185 = vmatpush.msra.mxu0 0.0
      %1186 = vmatpush.msra.mxu0 0.0
      %1187 = vmatpush.msra.mxu0 0.0
      %1188 = vmatpush.msra.mxu0 0.0
      %1189 = vmatpush.msra.mxu0 0.0
      %1190 = vmatpush.msra.mxu0 %v195
      %1191 = vmatpush.msra.mxu0 %v194
      %1192 = vmatpush.msra.mxu0 %v193
      %1193 = vmatpush.msra.mxu0 %v192
      %1194 = vmatpush.msra.mxu0 %v191
      %1195 = vmatpush.msra.mxu0 %v190
      %1196 = vmatpush.msra.mxu0 %v189
      %1197 = vmatpush.msra.mxu0 %v188
      %1198 = vmatmul.f32.gmra.mxu0 %v1175
      %v1199 = vpop.f32.mrf.mxu0
      %v1200 = vadd.f32 0.0, %v1199
      %1201 = vmatmul.f32.gmra.mxu0 %v1177
      %v1202 = vpop.f32.mrf.mxu0
      %v1203 = vadd.f32 0.0, %v1202
      %1204 = vmatmul.f32.gmra.mxu0 %v1180
      %v1205 = vpop.f32.mrf.mxu0
      %v1206 = vadd.f32 0.0, %v1205
      %1207 = vdwg.mxu0
      %v1208 = vadd.f32 %v1167, %v1200
      %v1209 = vadd.f32 %v1170, %v1203
      %v1210 = vadd.f32 %v1173, %v1206
      %v1211 = vadd.f32 %v1208, %v457
      %v1212 = vadd.f32 %v1209, %v457
      %v1213 = vadd.f32 %v1210, %v457
      %v1214 = vmax.f32 %v1211, 0.0
      %v1215 = vmax.f32 %v1212, 0.0
      %v1216 = vmax.f32 %v1213, 0.0
      %v1220 = vrot.slane %v1214, 7
      %v1221 = vrot.slane %v1215, 7
      %v1222 = vsel %vm338, %v1220, %v1221
      %v1223 = vrot.slane %v1216, 7
      %v1224 = vsel %vm338, %v1221, %v1223
      %v1226 = vsel %vm338, 0.0, %v1220
      %v1227 = vrot.slane %v1214, 1
      %v1228 = vrot.slane %v1215, 1
      %v1229 = vsel %vm346, %v1227, %v1228
      %v1230 = vrot.slane %v1216, 1
      %v1231 = vsel %vm346, %v1228, %v1230
      %v1233 = vsel %vm353, %v1230, 0.0
      %v1234 = vsel %vm355, %v1214, 0
      %v1236 = vsel %vm355, %v1215, 0
      %v1238 = vsel %vm355, %v1216, 0
      %1240 = vmatpush.msra.mxu0 0.0
      %1241 = vmatpush.msra.mxu0 0.0
      %1242 = vmatpush.msra.mxu0 0.0
      %1243 = vmatpush.msra.mxu0 0.0
      %1244 = vmatpush.msra.mxu0 0.0
      %1245 = vmatpush.msra.mxu0 0.0
      %1246 = vmatpush.msra.mxu0 0.0
      %1247 = vmatpush.msra.mxu0 0.0
      %1248 = vmatpush.msra.mxu0 %v187
      %1249 = vmatpush.msra.mxu0 %v186
      %1250 = vmatpush.msra.mxu0 %v185
      %1251 = vmatpush.msra.mxu0 %v184
      %1252 = vmatpush.msra.mxu0 %v183
      %1253 = vmatpush.msra.mxu0 %v182
      %1254 = vmatpush.msra.mxu0 %v181
      %1255 = vmatpush.msra.mxu0 %v180
      %1256 = vmatmul.f32.gmra.mxu0 %v1234
      %v1257 = vpop.f32.mrf.mxu0
      %v1258 = vadd.f32 0.0, %v1257
      %1259 = vmatmul.f32.gmra.mxu0 %v1236
      %v1260 = vpop.f32.mrf.mxu0
      %v1261 = vadd.f32 0.0, %v1260
      %1262 = vmatmul.f32.gmra.mxu0 %v1238
      %v1263 = vpop.f32.mrf.mxu0
      %1264 = vdwg.mxu0
      %v1266 = vsel %vm355, %v1226, 0
      %v1268 = vsel %vm355, %v1222, 0
      %v1270 = vsel %vm355, %v1224, 0
      %1272 = vmatpush.msra.mxu0 0.0
      %1273 = vmatpush.msra.mxu0 0.0
      %1274 = vmatpush.msra.mxu0 0.0
      %1275 = vmatpush.msra.mxu0 0.0
      %1276 = vmatpush.msra.mxu0 0.0
      %1277 = vmatpush.msra.mxu0 0.0
      %1278 = vmatpush.msra.mxu0 0.0
      %1279 = vmatpush.msra.mxu0 0.0
      %1280 = vmatpush.msra.mxu0 %v179
      %1281 = vmatpush.msra.mxu0 %v178
      %1282 = vmatpush.msra.mxu0 %v177
      %1283 = vmatpush.msra.mxu0 %v176
      %1284 = vmatpush.msra.mxu0 %v175
      %1285 = vmatpush.msra.mxu0 %v174
      %1286 = vmatpush.msra.mxu0 %v173
      %1287 = vmatpush.msra.mxu0 %v172
      %1288 = vmatmul.f32.gmra.mxu0 %v1266
      %v1289 = vpop.f32.mrf.mxu0
      %v1290 = vadd.f32 %v1258, %v1289
      %1291 = vmatmul.f32.gmra.mxu0 %v1268
      %v1292 = vpop.f32.mrf.mxu0
      %v1293 = vadd.f32 %v1261, %v1292
      %1294 = vmatmul.f32.gmra.mxu0 %v1270
      %v1295 = vpop.f32.mrf.mxu0
      %1296 = vdwg.mxu0
      %v1297 = vsel %vm355, %v1229, 0
      %v1299 = vsel %vm355, %v1231, 0
      %v1302 = vsel %vm355, %v1233, 0
      %1304 = vmatpush.msra.mxu0 0.0
      %1305 = vmatpush.msra.mxu0 0.0
      %1306 = vmatpush.msra.mxu0 0.0
      %1307 = vmatpush.msra.mxu0 0.0
      %1308 = vmatpush.msra.mxu0 0.0
      %1309 = vmatpush.msra.mxu0 0.0
      %1310 = vmatpush.msra.mxu0 0.0
      %1311 = vmatpush.msra.mxu0 0.0
      %1312 = vmatpush.msra.mxu0 %v195
      %1313 = vmatpush.msra.mxu0 %v194
      %1314 = vmatpush.msra.mxu0 %v193
      %1315 = vmatpush.msra.mxu0 %v192
      %1316 = vmatpush.msra.mxu0 %v191
      %1317 = vmatpush.msra.mxu0 %v190
      %1318 = vmatpush.msra.mxu0 %v189
      %1319 = vmatpush.msra.mxu0 %v188
      %1320 = vmatmul.f32.gmra.mxu0 %v1297
      %v1321 = vpop.f32.mrf.mxu0
      %v1322 = vadd.f32 0.0, %v1321
      %1323 = vmatmul.f32.gmra.mxu0 %v1299
      %v1324 = vpop.f32.mrf.mxu0
      %v1325 = vadd.f32 0.0, %v1324
      %1326 = vmatmul.f32.gmra.mxu0 %v1302
      %v1327 = vpop.f32.mrf.mxu0
      %1328 = vdwg.mxu0
      %v1329 = vadd.f32 %v1290, %v1322
      %v1330 = vadd.f32 %v1293, %v1325
      %v1331 = vadd.f32 %v1329, %v457
      %v1332 = vadd.f32 %v1330, %v457
      %v1333 = vmul.f32 %v1331, %v1090
      %v1334 = vmul.f32 %v1332, %v1091
      %v1336 = vrot.slane %v1333, 6
      %v1339 = vrot.slane %v1334, 4
      %v1341 = vsel %vm338, %v1333, %v1336
      %vm1342 = vcmask 1041408
      %v1343 = vsel %vm1342, %v1341, %v1339
      %vm1344 = vcmask 518144
      %1345 = vst.msk [vmem:[%s168] sm:$0x7] %vm1344, %v1343
      %p1346 = scmp.lt.s32.totalorder %s14, 1
      %s1347 = scalar_select %p1346, %s14, 1
      %s1348 = smul.addr %s1347, 4
      %s1349 = scalar_lea.vmem %s3, %s1348
      // Predicated region
      $region33: #{tpu_custom_call.1} parent=31 // pred_check
        %p1350 = pneg %p100
      $region34: #{tpu_custom_call.1} parent=31 // pred_check_branch
        %1352 = sbr.rel (%p1350) target = $region36
      $region35: #{tpu_custom_call.1} parent=31 // pred_region
        _
      $region36: #{tpu_custom_call.1} parent=31 // pred_fallthru
        _
    $region32: #{tpu_custom_call.1} parent=5 // pred_fallthru
      _
    %p1353 = scmp.le.s32.totalorder 2, %s9
    // Predicated region
    $region37: #{tpu_custom_call.1} parent=5 // pred_check
      %p1354 = pneg %p1353
    $region38: #{tpu_custom_call.1} parent=5 // pred_check_branch
      %1356 = sbr.rel (%p1354) target = $region40
    $region39: #{tpu_custom_call.1} parent=5 // pred_region
      %s1357 = ssub.s32 %s9, 2
      // Predicated region
      $region41: #{tpu_custom_call.1} parent=39 // pred_check
        %p1358 = pneg %p106
      $region42: #{tpu_custom_call.1} parent=39 // pred_check_branch
        %1360 = sbr.rel (%p1358) target = $region44
      $region43: #{tpu_custom_call.1} parent=39 // pred_region
        %p1361 = scmp.lt.s32.totalorder %s15, 1
        %s1362 = scalar_select %p1361, %s15, 1
        %s1363 = smul.addr %s1362, 4
        %s1364 = scalar_lea.vmem %s3, %s1363
      $region44: #{tpu_custom_call.1} parent=39 // pred_fallthru
        _
    $region40: #{tpu_custom_call.1} parent=5 // pred_fallthru
      _
  $region6: #{tpu_custom_call.1} parent=0 // loop_footer
    %s13 = sadd.s32 1, %s9
  $region7: #{tpu_custom_call.1} parent=0 // loop_footer_branch
    %8 = sbr.rel target = $region3
  $region8: #{tpu_custom_call.1} parent=0 // loop_exit
    _

</llo_original>
